<compile_context>
chip_gen: v7x
topology: tpu7x:2x2x1
jax: 0.10.0
libtpu: 0.0.40
codegen_flags: <defaults>
</compile_context>

<pallas_src>
import functools

import jax
import jax.numpy as jnp
import numpy as np
from jax import lax
from jax.experimental import pallas as pl
from jax.experimental.pallas import tpu as pltpu

# ----------------------------- settings ------------------------------------
VOCAB_SIZE = 32
EMBEDDING_DIM = 16
HIDDEN_SIZE = 32
TARGET_SIZE = 8
WORD_PAD_ID = 0


def _ceil8(n):
    return (n + 7) // 8 * 8


# Packed weight-slab layout (f32, width = 8*H lanes, every segment 8-row aligned)
SLAB_W = 8 * HIDDEN_SIZE                                 # 256
R_TABLE = 0                                              # (V, 8H) embed@Wih + bias
R_WBLK = R_TABLE + _ceil8(VOCAB_SIZE)                    # (2H, 4H) [whh_f; whh_b]
R_WLIN = R_WBLK + _ceil8(2 * HIDDEN_SIZE)                # (2H, K)  linear weight
R_MISC = R_WLIN + _ceil8(2 * HIDDEN_SIZE)                # rows: blin / start / end
R_TRANS = R_MISC + 8                                     # (K, K) CRF transitions
SLAB_ROWS = R_TRANS + _ceil8(TARGET_SIZE)


# ----------------------- Fused BiLSTM + Linear + CRF kernel -----------------
def fused_bilstm_crf_kernel(idm_ref, slab_ref, score_out_ref, hist_out_ref, *, T, B):
    H, K, V = HIDDEN_SIZE, TARGET_SIZE, VOCAB_SIZE
    G4 = 4 * H
    f32, bf16 = jnp.float32, jnp.bfloat16

    # ---- slice the single packed weight slab (all hoisted, done once) -------
    table_bf = slab_ref[R_TABLE:R_TABLE + V, :].astype(bf16)               # (V, 8H)
    w_blk_bf = slab_ref[R_WBLK:R_WBLK + 2 * H, 0:G4].astype(bf16)          # (2H, 4H)
    wlin_bf = slab_ref[R_WLIN:R_WLIN + 2 * H, 0:G4][:, :K].astype(bf16)    # (2H, K)
    misc = slab_ref[R_MISC:R_MISC + 8, 0:G4][:, :K]                        # (8, K)
    blin, startv, endv = misc[0:1], misc[1:2], misc[2:3]                   # (1, K) each
    trans_b = slab_ref[R_TRANS:R_TRANS + 8, 0:G4][:K, :K][None, :, :]      # (1, K, K)

    # ---- ids / mask from one int32 buffer (time-major) ----------------------
    idm = idm_ref[...]                              # (T*B, 2): col0 = ids, col1 = mask
    ids = idm[:, 0:1]
    mask_valid = idm[:, 1:2] > 0                    # hoisted out of the Viterbi loop

    # ---- fused embedding lookup + input projection: ONE matmul --------------
    iota_v = lax.broadcasted_iota(jnp.int32, (T * B, V), 1)
    onehot_bf = jnp.where(ids == iota_v, 1.0, 0.0).astype(bf16)            # (T*B, V)
    xproj = jnp.dot(onehot_bf, table_bf, preferred_element_type=f32)       # (T*B, 8H)

    # per-step stacked input gates (fwd t = step, bwd t = T-1-step); these only
    # depend on the prologue matmul, so they are off the serial carry chain.
    xg_steps = []
    for step in range(T):
        tf, tb = step, T - 1 - step
        xg_steps.append(jnp.concatenate(
            [xproj[tf * B:(tf + 1) * B, :G4],
             xproj[tb * B:(tb + 1) * B, G4:]], axis=0))                    # (2B, 4H)

    # ---- merged fwd/bwd LSTM recurrence: ONE block-diag matmul per step -----
    row_iota = lax.broadcasted_iota(jnp.int32, (2 * B, 1), 0)
    mf = jnp.where(row_iota < B, 1.0, 0.0)          # selects fwd rows
    mb_ = 1.0 - mf                                  # selects bwd rows
    h_stack_bf = jnp.zeros((2 * B, 2 * H), bf16)    # [hf | 0] rows :B, [0 | hb] rows B:
    c_both = jnp.zeros((2 * B, H), f32)
    ef = [None] * T                                 # fwd emission contribution per t
    eb = [None] * T                                 # bwd emission contribution per t

    for step in range(T):
        tf, tb = step, T - 1 - step
        g = jnp.dot(h_stack_bf, w_blk_bf, preferred_element_type=f32) + xg_steps[step]
        # full-width activations, then slice (PyTorch gate order i, f, g, o)
        sig = jax.nn.sigmoid(g)
        tnh = jnp.tanh(g)
        i_g = sig[:, 0 * H:1 * H]
        f_g = sig[:, 1 * H:2 * H]
        g_g = tnh[:, 2 * H:3 * H]
        o_g = sig[:, 3 * H:4 * H]
        c_both = f_g * c_both + i_g * g_g
        h_both = o_g * jnp.tanh(c_both)                                     # (2B, H) f32
        # block-structured hidden: reused for next recurrent matmul AND emissions
        h_stack_bf = jnp.concatenate([h_both * mf, h_both * mb_], axis=1).astype(bf16)
        e_all = jnp.dot(h_stack_bf, wlin_bf, preferred_element_type=f32)    # (2B, K)
        ef[tf] = e_all[:B]
        eb[tb] = e_all[B:]

    # ---- CRF Viterbi forward pass (masked), fully unrolled -------------------
    prev_iota = lax.broadcasted_iota(jnp.int32, (B, K, K), 1)               # hoisted
    score = startv + (ef[0] + eb[0] + blin)                                 # (B, K)
    hist_parts = [jnp.zeros((B, K), jnp.int32)]     # t=0 placeholder (never read)
    for t in range(1, T):
        emit_t = ef[t] + eb[t] + blin                                       # (B, K)
        ns = score[:, :, None] + trans_b + emit_t[:, None, :]               # (B, Kp, Kn)
        best = jnp.max(ns, axis=1)                                          # (B, K)
        best_prev = jnp.min(jnp.where(ns == best[:, None, :], prev_iota, K),
                            axis=1).astype(jnp.int32)                       # (B, K)
        mb = mask_valid[t * B:(t + 1) * B]                                  # (B, 1)
        score = jnp.where(mb, best, score)
        hist_parts.append(best_prev)

    score_out_ref[...] = score + endv
    hist_out_ref[...] = jnp.concatenate(hist_parts, axis=0)                 # (T*B, K)


# ------------------------------ wrapper --------------------------------------
def pack_weight_slab(params, crf_params):
    """Pack all weights into one padded f32 slab (one DMA) with fused
    embedding->input-projection table precomputed wrapper-side."""
    K = TARGET_SIZE
    f32 = jnp.float32
    wih_cat = jnp.concatenate([params["wih_f"], params["wih_b"]], axis=1)    # (E, 8H)
    bias_cat = jnp.concatenate([params["b_f"], params["b_b"]], axis=1)       # (1, 8H)
    # bias folded into the table: each one-hot row sums to exactly 1
    table = params["embed"] @ wih_cat + bias_cat                             # (V, 8H)
    w_blk = jnp.concatenate([params["whh_f"], params["whh_b"]], axis=0)      # (2H, 4H)
    misc = jnp.zeros((8, K), f32)
    misc = misc.at[0].set(params["blin"][0])
    misc = misc.at[1].set(crf_params["start"][0])
    misc = misc.at[2].set(crf_params["end"][0])
    trans = jnp.zeros((_ceil8(K), K), f32).at[:K].set(crf_params["transitions"])

    def seg(x):
        r, c = x.shape
        return jnp.pad(x.astype(f32), ((0, _ceil8(r) - r), (0, SLAB_W - c)))

    slab = jnp.concatenate(
        [seg(table), seg(w_blk), seg(params["wlin"]), seg(misc), seg(trans)], axis=0)
    assert slab.shape == (SLAB_ROWS, SLAB_W)
    return slab


def bilstm_crf_forward(idm, slab, T, B):
    K = TARGET_SIZE
    vmem = pl.BlockSpec(memory_space=pltpu.MemorySpace.VMEM)
    kernel = functools.partial(fused_bilstm_crf_kernel, T=T, B=B)
    return pl.pallas_call(
        kernel,
        out_shape=(
            jax.ShapeDtypeStruct((B, K), jnp.float32),      # final Viterbi scores
            jax.ShapeDtypeStruct((T * B, K), jnp.int32),    # backpointers, time-major
        ),
        in_specs=[vmem, vmem],
        out_specs=(vmem, vmem),
    )(idm, slab)


# ------------------------------- Model glue ---------------------------------
def init_params(key):
    ks = jax.random.split(key, 12)
    H, E, K, V = HIDDEN_SIZE, EMBEDDING_DIM, TARGET_SIZE, VOCAB_SIZE
    u = lambda k, shape: jax.random.uniform(k, shape, jnp.float32, -0.1, 0.1)
    embed = u(ks[0], (V, E)).at[WORD_PAD_ID].set(0.0)      # padding_idx row = 0
    params = {
        "embed": embed,
        # forward LSTM (weights stored transposed: (in, 4H)); bias = b_ih + b_hh
        "wih_f": u(ks[1], (E, 4 * H)),
        "whh_f": u(ks[2], (H, 4 * H)),
        "b_f":   u(ks[3], (1, 4 * H)),
        # backward LSTM
        "wih_b": u(ks[4], (E, 4 * H)),
        "whh_b": u(ks[5], (H, 4 * H)),
        "b_b":   u(ks[6], (1, 4 * H)),
        # linear 2H -> K   (rows [:H] multiply the fwd hidden, [H:] the bwd hidden)
        "wlin":  u(ks[7], (2 * H, K)),
        "blin":  u(ks[8], (1, K)),
    }
    crf_params = {
        "transitions": u(ks[9], (K, K)),
        "start":       u(ks[10], (1, K)),
        "end":         u(ks[11], (1, K)),
    }
    return params, crf_params


@jax.jit
def model_forward(input_ids, mask, params, crf_params):
    """input_ids: (B, T) int32, mask: (B, T) int32 (left-aligned, mask[:,0]=1).
    Returns (final_scores (B,K), history (T*B,K)); backtrace done by caller."""
    B, T = input_ids.shape
    ids_t = jnp.transpose(input_ids, (1, 0)).reshape(T * B, 1)
    mask_t = jnp.transpose(mask, (1, 0)).reshape(T * B, 1)
    idm = jnp.concatenate([ids_t, mask_t], axis=1).astype(jnp.int32)   # (T*B, 2)
    slab = pack_weight_slab(params, crf_params)
    return bilstm_crf_forward(idm, slab, T, B)


def crf_backtrace(score, hist, mask):
    """torchcrf-style decode: returns list of tag lists (one per batch).
    hist is time-major flattened: row t*B + b holds backpointers for step t."""
    score_np = np.asarray(score)
    hist_np = np.asarray(hist)
    B = score_np.shape[0]
    lengths = np.asarray(mask).sum(axis=1)
    decoded = []
    for b in range(B):
        L = int(lengths[b])
        tag = int(np.argmax(score_np[b]))
        tags = [tag]
        for t in range(L - 1, 0, -1):
            tag = int(hist_np[t * B + b, tag])
            tags.append(tag)
        tags.reverse()
        decoded.append(tags)
    return decoded


# --------------------------------- main -------------------------------------
if __name__ == "__main__":
    B, T = 2, 8
    key = jax.random.PRNGKey(0)
    pkey, dkey = jax.random.split(key)
    params, crf_params = init_params(pkey)

    input_ids = jax.random.randint(dkey, (B, T), 1, VOCAB_SIZE, dtype=jnp.int32)
    lengths = np.array([T, 5])
    mask_np = np.zeros((B, T), dtype=np.int32)
    for b in range(B):
        mask_np[b, :lengths[b]] = 1
    mask = jnp.asarray(mask_np)
    # pad input beyond the valid length with WORD_PAD_ID
    input_ids = jnp.where(mask > 0, input_ids, WORD_PAD_ID)

    score, hist = model_forward(input_ids, mask, params, crf_params)
    jax.block_until_ready((score, hist))

    tags = crf_backtrace(score, hist, mask)
    assert len(tags) == B
    assert [len(t) for t in tags] == list(lengths)
    print("KERNEL_OK")
</pallas_src>

<mosaic_0001>
module attributes {stable_mosaic.version = 11 : i64} {
  func.func @fused_bilstm_crf_kernel(%arg0: memref<16x2xi32, #tpu.memory_space<vmem>>, %arg1: memref<176x256xf32, #tpu.memory_space<vmem>>, %arg2: memref<2x8xf32, #tpu.memory_space<vmem>>, %arg3: memref<16x8xi32, #tpu.memory_space<vmem>>) attributes {dimension_semantics = [], scalar_prefetch = 0 : i64, scratch_operands = 0 : i64, tpu.core_type = #tpu.core_type<tc>} {
    %c0 = arith.constant 0 : index
    %c0_0 = arith.constant 0 : index
    %0 = vector.load %arg1[%c0, %c0_0] : memref<176x256xf32, #tpu.memory_space<vmem>>, vector<32x256xf32>
    %1 = arith.truncf %0 : vector<32x256xf32> to vector<32x256xbf16>
    %c32 = arith.constant 32 : index
    %c0_1 = arith.constant 0 : index
    %2 = vector.load %arg1[%c32, %c0_1] : memref<176x256xf32, #tpu.memory_space<vmem>>, vector<64x128xf32>
    %3 = arith.truncf %2 : vector<64x128xf32> to vector<64x128xbf16>
    %c96 = arith.constant 96 : index
    %c0_2 = arith.constant 0 : index
    %4 = vector.load %arg1[%c96, %c0_2] : memref<176x256xf32, #tpu.memory_space<vmem>>, vector<64x128xf32>
    %5 = vector.extract_strided_slice %4 {offsets = [0, 0], sizes = [64, 8], strides = [1, 1]} : vector<64x128xf32> to vector<64x8xf32>
    %6 = arith.truncf %5 : vector<64x8xf32> to vector<64x8xbf16>
    %c160 = arith.constant 160 : index
    %c0_3 = arith.constant 0 : index
    %7 = vector.load %arg1[%c160, %c0_3] : memref<176x256xf32, #tpu.memory_space<vmem>>, vector<8x128xf32>
    %8 = vector.extract_strided_slice %7 {offsets = [0, 0], sizes = [8, 8], strides = [1, 1]} : vector<8x128xf32> to vector<8x8xf32>
    %9 = vector.extract_strided_slice %8 {offsets = [0, 0], sizes = [1, 8], strides = [1, 1]} : vector<8x8xf32> to vector<1x8xf32>
    %10 = vector.extract_strided_slice %8 {offsets = [1, 0], sizes = [1, 8], strides = [1, 1]} : vector<8x8xf32> to vector<1x8xf32>
    %11 = vector.extract_strided_slice %8 {offsets = [2, 0], sizes = [1, 8], strides = [1, 1]} : vector<8x8xf32> to vector<1x8xf32>
    %c168 = arith.constant 168 : index
    %c0_4 = arith.constant 0 : index
    %12 = vector.load %arg1[%c168, %c0_4] : memref<176x256xf32, #tpu.memory_space<vmem>>, vector<8x128xf32>
    %13 = vector.extract_strided_slice %12 {offsets = [0, 0], sizes = [8, 8], strides = [1, 1]} : vector<8x128xf32> to vector<8x8xf32>
    %14 = vector.shape_cast %13 : vector<8x8xf32> to vector<1x8x8xf32>
    %c0_5 = arith.constant 0 : index
    %c0_6 = arith.constant 0 : index
    %15 = vector.load %arg0[%c0_5, %c0_6] : memref<16x2xi32, #tpu.memory_space<vmem>>, vector<16x2xi32>
    %16 = vector.extract_strided_slice %15 {offsets = [0, 0], sizes = [16, 1], strides = [1, 1]} : vector<16x2xi32> to vector<16x1xi32>
    %17 = vector.extract_strided_slice %15 {offsets = [0, 1], sizes = [16, 1], strides = [1, 1]} : vector<16x2xi32> to vector<16x1xi32>
    %c0_i32 = arith.constant 0 : i32
    %18 = vector.broadcast %c0_i32 : i32 to vector<16x1xi32>
    %19 = arith.cmpi sgt, %17, %18 : vector<16x1xi32>
    %20 = tpu.iota {dimensions = array<i32: 1>} : vector<16x32xi32>
    %21 = vector.broadcast %16 : vector<16x1xi32> to vector<16x32xi32>
    %22 = arith.cmpi eq, %21, %20 : vector<16x32xi32>
    %cst = arith.constant 1.000000e+00 : f32
    %cst_7 = arith.constant 0.000000e+00 : f32
    %23 = vector.broadcast %cst : f32 to vector<16x32xf32>
    %24 = vector.broadcast %cst_7 : f32 to vector<16x32xf32>
    %25 = arith.select %22, %23, %24 : vector<16x32xi1>, vector<16x32xf32>
    %26 = arith.truncf %25 : vector<16x32xf32> to vector<16x32xbf16>
    %cst_8 = arith.constant dense<0.000000e+00> : vector<16x256xf32>
    %27 = tpu.matmul %26, %1, %cst_8 {dimension_numbers = #tpu.dot_dimension_numbers<[1], [0], [0], [1], [0, 0, 1, 1], [], []>} : vector<16x32xbf16>, vector<32x256xbf16>, vector<16x256xf32> -> vector<16x256xf32>
    %28 = vector.extract_strided_slice %27 {offsets = [0, 0], sizes = [2, 128], strides = [1, 1]} : vector<16x256xf32> to vector<2x128xf32>
    %29 = vector.extract_strided_slice %27 {offsets = [14, 128], sizes = [2, 128], strides = [1, 1]} : vector<16x256xf32> to vector<2x128xf32>
    %30 = tpu.concatenate %28, %29 in 0 : vector<2x128xf32>, vector<2x128xf32> -> vector<4x128xf32>
    %31 = vector.extract_strided_slice %27 {offsets = [2, 0], sizes = [2, 128], strides = [1, 1]} : vector<16x256xf32> to vector<2x128xf32>
    %32 = vector.extract_strided_slice %27 {offsets = [12, 128], sizes = [2, 128], strides = [1, 1]} : vector<16x256xf32> to vector<2x128xf32>
    %33 = tpu.concatenate %31, %32 in 0 : vector<2x128xf32>, vector<2x128xf32> -> vector<4x128xf32>
    %34 = vector.extract_strided_slice %27 {offsets = [4, 0], sizes = [2, 128], strides = [1, 1]} : vector<16x256xf32> to vector<2x128xf32>
    %35 = vector.extract_strided_slice %27 {offsets = [10, 128], sizes = [2, 128], strides = [1, 1]} : vector<16x256xf32> to vector<2x128xf32>
    %36 = tpu.concatenate %34, %35 in 0 : vector<2x128xf32>, vector<2x128xf32> -> vector<4x128xf32>
    %37 = vector.extract_strided_slice %27 {offsets = [6, 0], sizes = [2, 128], strides = [1, 1]} : vector<16x256xf32> to vector<2x128xf32>
    %38 = vector.extract_strided_slice %27 {offsets = [8, 128], sizes = [2, 128], strides = [1, 1]} : vector<16x256xf32> to vector<2x128xf32>
    %39 = tpu.concatenate %37, %38 in 0 : vector<2x128xf32>, vector<2x128xf32> -> vector<4x128xf32>
    %40 = vector.extract_strided_slice %27 {offsets = [8, 0], sizes = [2, 128], strides = [1, 1]} : vector<16x256xf32> to vector<2x128xf32>
    %41 = vector.extract_strided_slice %27 {offsets = [6, 128], sizes = [2, 128], strides = [1, 1]} : vector<16x256xf32> to vector<2x128xf32>
    %42 = tpu.concatenate %40, %41 in 0 : vector<2x128xf32>, vector<2x128xf32> -> vector<4x128xf32>
    %43 = vector.extract_strided_slice %27 {offsets = [10, 0], sizes = [2, 128], strides = [1, 1]} : vector<16x256xf32> to vector<2x128xf32>
    %44 = vector.extract_strided_slice %27 {offsets = [4, 128], sizes = [2, 128], strides = [1, 1]} : vector<16x256xf32> to vector<2x128xf32>
    %45 = tpu.concatenate %43, %44 in 0 : vector<2x128xf32>, vector<2x128xf32> -> vector<4x128xf32>
    %46 = vector.extract_strided_slice %27 {offsets = [12, 0], sizes = [2, 128], strides = [1, 1]} : vector<16x256xf32> to vector<2x128xf32>
    %47 = vector.extract_strided_slice %27 {offsets = [2, 128], sizes = [2, 128], strides = [1, 1]} : vector<16x256xf32> to vector<2x128xf32>
    %48 = tpu.concatenate %46, %47 in 0 : vector<2x128xf32>, vector<2x128xf32> -> vector<4x128xf32>
    %49 = vector.extract_strided_slice %27 {offsets = [14, 0], sizes = [2, 128], strides = [1, 1]} : vector<16x256xf32> to vector<2x128xf32>
    %50 = vector.extract_strided_slice %27 {offsets = [0, 128], sizes = [2, 128], strides = [1, 1]} : vector<16x256xf32> to vector<2x128xf32>
    %51 = tpu.concatenate %49, %50 in 0 : vector<2x128xf32>, vector<2x128xf32> -> vector<4x128xf32>
    %52 = tpu.iota {dimensions = array<i32: 0>} : vector<4x1xi32>
    %c2_i32 = arith.constant 2 : i32
    %53 = vector.broadcast %c2_i32 : i32 to vector<4x1xi32>
    %54 = arith.cmpi slt, %52, %53 : vector<4x1xi32>
    %cst_9 = arith.constant 1.000000e+00 : f32
    %cst_10 = arith.constant 0.000000e+00 : f32
    %55 = vector.broadcast %cst_9 : f32 to vector<4x1xf32>
    %56 = vector.broadcast %cst_10 : f32 to vector<4x1xf32>
    %57 = arith.select %54, %55, %56 : vector<4x1xi1>, vector<4x1xf32>
    %cst_11 = arith.constant 1.000000e+00 : f32
    %58 = vector.broadcast %cst_11 : f32 to vector<4x1xf32>
    %59 = arith.subf %58, %57 : vector<4x1xf32>
    %cst_12 = arith.constant 0.000000e+00 : bf16
    %60 = vector.broadcast %cst_12 : bf16 to vector<4x64xbf16>
    %cst_13 = arith.constant 0.000000e+00 : f32
    %61 = vector.broadcast %cst_13 : f32 to vector<4x32xf32>
    %cst_14 = arith.constant dense<0.000000e+00> : vector<4x128xf32>
    %62 = tpu.matmul %60, %3, %cst_14 {dimension_numbers = #tpu.dot_dimension_numbers<[1], [0], [0], [1], [0, 0, 1, 1], [], []>} : vector<4x64xbf16>, vector<64x128xbf16>, vector<4x128xf32> -> vector<4x128xf32>
    %63 = arith.addf %62, %30 : vector<4x128xf32>
    %64 = arith.negf %63 : vector<4x128xf32>
    %65 = math.exp %64 : vector<4x128xf32>
    %cst_15 = arith.constant 1.000000e+00 : f32
    %66 = vector.broadcast %cst_15 : f32 to vector<4x128xf32>
    %67 = arith.addf %66, %65 : vector<4x128xf32>
    %68 = arith.divf %66, %67 : vector<4x128xf32>
    %69 = math.tanh %63 : vector<4x128xf32>
    %70 = vector.extract_strided_slice %68 {offsets = [0, 0], sizes = [4, 32], strides = [1, 1]} : vector<4x128xf32> to vector<4x32xf32>
    %71 = vector.extract_strided_slice %68 {offsets = [0, 32], sizes = [4, 32], strides = [1, 1]} : vector<4x128xf32> to vector<4x32xf32>
    %72 = vector.extract_strided_slice %69 {offsets = [0, 64], sizes = [4, 32], strides = [1, 1]} : vector<4x128xf32> to vector<4x32xf32>
    %73 = vector.extract_strided_slice %68 {offsets = [0, 96], sizes = [4, 32], strides = [1, 1]} : vector<4x128xf32> to vector<4x32xf32>
    %74 = arith.mulf %71, %61 : vector<4x32xf32>
    %75 = arith.mulf %70, %72 : vector<4x32xf32>
    %76 = arith.addf %74, %75 : vector<4x32xf32>
    %77 = math.tanh %76 : vector<4x32xf32>
    %78 = arith.mulf %73, %77 : vector<4x32xf32>
    %79 = vector.broadcast %57 : vector<4x1xf32> to vector<4x32xf32>
    %80 = arith.mulf %78, %79 : vector<4x32xf32>
    %81 = vector.broadcast %59 : vector<4x1xf32> to vector<4x32xf32>
    %82 = arith.mulf %78, %81 : vector<4x32xf32>
    %83 = tpu.concatenate %80, %82 in 1 : vector<4x32xf32>, vector<4x32xf32> -> vector<4x64xf32>
    %84 = arith.truncf %83 : vector<4x64xf32> to vector<4x64xbf16>
    %cst_16 = arith.constant dense<0.000000e+00> : vector<4x8xf32>
    %85 = tpu.matmul %84, %6, %cst_16 {dimension_numbers = #tpu.dot_dimension_numbers<[1], [0], [0], [1], [0, 0, 1, 1], [], []>} : vector<4x64xbf16>, vector<64x8xbf16>, vector<4x8xf32> -> vector<4x8xf32>
    %86 = vector.extract_strided_slice %85 {offsets = [0, 0], sizes = [2, 8], strides = [1, 1]} : vector<4x8xf32> to vector<2x8xf32>
    %87 = vector.extract_strided_slice %85 {offsets = [2, 0], sizes = [2, 8], strides = [1, 1]} : vector<4x8xf32> to vector<2x8xf32>
    %cst_17 = arith.constant dense<0.000000e+00> : vector<4x128xf32>
    %88 = tpu.matmul %84, %3, %cst_17 {dimension_numbers = #tpu.dot_dimension_numbers<[1], [0], [0], [1], [0, 0, 1, 1], [], []>} : vector<4x64xbf16>, vector<64x128xbf16>, vector<4x128xf32> -> vector<4x128xf32>
    %89 = arith.addf %88, %33 : vector<4x128xf32>
    %90 = arith.negf %89 : vector<4x128xf32>
    %91 = math.exp %90 : vector<4x128xf32>
    %cst_18 = arith.constant 1.000000e+00 : f32
    %92 = vector.broadcast %cst_18 : f32 to vector<4x128xf32>
    %93 = arith.addf %92, %91 : vector<4x128xf32>
    %94 = arith.divf %92, %93 : vector<4x128xf32>
    %95 = math.tanh %89 : vector<4x128xf32>
    %96 = vector.extract_strided_slice %94 {offsets = [0, 0], sizes = [4, 32], strides = [1, 1]} : vector<4x128xf32> to vector<4x32xf32>
    %97 = vector.extract_strided_slice %94 {offsets = [0, 32], sizes = [4, 32], strides = [1, 1]} : vector<4x128xf32> to vector<4x32xf32>
    %98 = vector.extract_strided_slice %95 {offsets = [0, 64], sizes = [4, 32], strides = [1, 1]} : vector<4x128xf32> to vector<4x32xf32>
    %99 = vector.extract_strided_slice %94 {offsets = [0, 96], sizes = [4, 32], strides = [1, 1]} : vector<4x128xf32> to vector<4x32xf32>
    %100 = arith.mulf %97, %76 : vector<4x32xf32>
    %101 = arith.mulf %96, %98 : vector<4x32xf32>
    %102 = arith.addf %100, %101 : vector<4x32xf32>
    %103 = math.tanh %102 : vector<4x32xf32>
    %104 = arith.mulf %99, %103 : vector<4x32xf32>
    %105 = vector.broadcast %57 : vector<4x1xf32> to vector<4x32xf32>
    %106 = arith.mulf %104, %105 : vector<4x32xf32>
    %107 = vector.broadcast %59 : vector<4x1xf32> to vector<4x32xf32>
    %108 = arith.mulf %104, %107 : vector<4x32xf32>
    %109 = tpu.concatenate %106, %108 in 1 : vector<4x32xf32>, vector<4x32xf32> -> vector<4x64xf32>
    %110 = arith.truncf %109 : vector<4x64xf32> to vector<4x64xbf16>
    %cst_19 = arith.constant dense<0.000000e+00> : vector<4x8xf32>
    %111 = tpu.matmul %110, %6, %cst_19 {dimension_numbers = #tpu.dot_dimension_numbers<[1], [0], [0], [1], [0, 0, 1, 1], [], []>} : vector<4x64xbf16>, vector<64x8xbf16>, vector<4x8xf32> -> vector<4x8xf32>
    %112 = vector.extract_strided_slice %111 {offsets = [0, 0], sizes = [2, 8], strides = [1, 1]} : vector<4x8xf32> to vector<2x8xf32>
    %113 = vector.extract_strided_slice %111 {offsets = [2, 0], sizes = [2, 8], strides = [1, 1]} : vector<4x8xf32> to vector<2x8xf32>
    %cst_20 = arith.constant dense<0.000000e+00> : vector<4x128xf32>
    %114 = tpu.matmul %110, %3, %cst_20 {dimension_numbers = #tpu.dot_dimension_numbers<[1], [0], [0], [1], [0, 0, 1, 1], [], []>} : vector<4x64xbf16>, vector<64x128xbf16>, vector<4x128xf32> -> vector<4x128xf32>
    %115 = arith.addf %114, %36 : vector<4x128xf32>
    %116 = arith.negf %115 : vector<4x128xf32>
    %117 = math.exp %116 : vector<4x128xf32>
    %cst_21 = arith.constant 1.000000e+00 : f32
    %118 = vector.broadcast %cst_21 : f32 to vector<4x128xf32>
    %119 = arith.addf %118, %117 : vector<4x128xf32>
    %120 = arith.divf %118, %119 : vector<4x128xf32>
    %121 = math.tanh %115 : vector<4x128xf32>
    %122 = vector.extract_strided_slice %120 {offsets = [0, 0], sizes = [4, 32], strides = [1, 1]} : vector<4x128xf32> to vector<4x32xf32>
    %123 = vector.extract_strided_slice %120 {offsets = [0, 32], sizes = [4, 32], strides = [1, 1]} : vector<4x128xf32> to vector<4x32xf32>
    %124 = vector.extract_strided_slice %121 {offsets = [0, 64], sizes = [4, 32], strides = [1, 1]} : vector<4x128xf32> to vector<4x32xf32>
    %125 = vector.extract_strided_slice %120 {offsets = [0, 96], sizes = [4, 32], strides = [1, 1]} : vector<4x128xf32> to vector<4x32xf32>
    %126 = arith.mulf %123, %102 : vector<4x32xf32>
    %127 = arith.mulf %122, %124 : vector<4x32xf32>
    %128 = arith.addf %126, %127 : vector<4x32xf32>
    %129 = math.tanh %128 : vector<4x32xf32>
    %130 = arith.mulf %125, %129 : vector<4x32xf32>
    %131 = vector.broadcast %57 : vector<4x1xf32> to vector<4x32xf32>
    %132 = arith.mulf %130, %131 : vector<4x32xf32>
    %133 = vector.broadcast %59 : vector<4x1xf32> to vector<4x32xf32>
    %134 = arith.mulf %130, %133 : vector<4x32xf32>
    %135 = tpu.concatenate %132, %134 in 1 : vector<4x32xf32>, vector<4x32xf32> -> vector<4x64xf32>
    %136 = arith.truncf %135 : vector<4x64xf32> to vector<4x64xbf16>
    %cst_22 = arith.constant dense<0.000000e+00> : vector<4x8xf32>
    %137 = tpu.matmul %136, %6, %cst_22 {dimension_numbers = #tpu.dot_dimension_numbers<[1], [0], [0], [1], [0, 0, 1, 1], [], []>} : vector<4x64xbf16>, vector<64x8xbf16>, vector<4x8xf32> -> vector<4x8xf32>
    %138 = vector.extract_strided_slice %137 {offsets = [0, 0], sizes = [2, 8], strides = [1, 1]} : vector<4x8xf32> to vector<2x8xf32>
    %139 = vector.extract_strided_slice %137 {offsets = [2, 0], sizes = [2, 8], strides = [1, 1]} : vector<4x8xf32> to vector<2x8xf32>
    %cst_23 = arith.constant dense<0.000000e+00> : vector<4x128xf32>
    %140 = tpu.matmul %136, %3, %cst_23 {dimension_numbers = #tpu.dot_dimension_numbers<[1], [0], [0], [1], [0, 0, 1, 1], [], []>} : vector<4x64xbf16>, vector<64x128xbf16>, vector<4x128xf32> -> vector<4x128xf32>
    %141 = arith.addf %140, %39 : vector<4x128xf32>
    %142 = arith.negf %141 : vector<4x128xf32>
    %143 = math.exp %142 : vector<4x128xf32>
    %cst_24 = arith.constant 1.000000e+00 : f32
    %144 = vector.broadcast %cst_24 : f32 to vector<4x128xf32>
    %145 = arith.addf %144, %143 : vector<4x128xf32>
    %146 = arith.divf %144, %145 : vector<4x128xf32>
    %147 = math.tanh %141 : vector<4x128xf32>
    %148 = vector.extract_strided_slice %146 {offsets = [0, 0], sizes = [4, 32], strides = [1, 1]} : vector<4x128xf32> to vector<4x32xf32>
    %149 = vector.extract_strided_slice %146 {offsets = [0, 32], sizes = [4, 32], strides = [1, 1]} : vector<4x128xf32> to vector<4x32xf32>
    %150 = vector.extract_strided_slice %147 {offsets = [0, 64], sizes = [4, 32], strides = [1, 1]} : vector<4x128xf32> to vector<4x32xf32>
    %151 = vector.extract_strided_slice %146 {offsets = [0, 96], sizes = [4, 32], strides = [1, 1]} : vector<4x128xf32> to vector<4x32xf32>
    %152 = arith.mulf %149, %128 : vector<4x32xf32>
    %153 = arith.mulf %148, %150 : vector<4x32xf32>
    %154 = arith.addf %152, %153 : vector<4x32xf32>
    %155 = math.tanh %154 : vector<4x32xf32>
    %156 = arith.mulf %151, %155 : vector<4x32xf32>
    %157 = vector.broadcast %57 : vector<4x1xf32> to vector<4x32xf32>
    %158 = arith.mulf %156, %157 : vector<4x32xf32>
    %159 = vector.broadcast %59 : vector<4x1xf32> to vector<4x32xf32>
    %160 = arith.mulf %156, %159 : vector<4x32xf32>
    %161 = tpu.concatenate %158, %160 in 1 : vector<4x32xf32>, vector<4x32xf32> -> vector<4x64xf32>
    %162 = arith.truncf %161 : vector<4x64xf32> to vector<4x64xbf16>
    %cst_25 = arith.constant dense<0.000000e+00> : vector<4x8xf32>
    %163 = tpu.matmul %162, %6, %cst_25 {dimension_numbers = #tpu.dot_dimension_numbers<[1], [0], [0], [1], [0, 0, 1, 1], [], []>} : vector<4x64xbf16>, vector<64x8xbf16>, vector<4x8xf32> -> vector<4x8xf32>
    %164 = vector.extract_strided_slice %163 {offsets = [0, 0], sizes = [2, 8], strides = [1, 1]} : vector<4x8xf32> to vector<2x8xf32>
    %165 = vector.extract_strided_slice %163 {offsets = [2, 0], sizes = [2, 8], strides = [1, 1]} : vector<4x8xf32> to vector<2x8xf32>
    %cst_26 = arith.constant dense<0.000000e+00> : vector<4x128xf32>
    %166 = tpu.matmul %162, %3, %cst_26 {dimension_numbers = #tpu.dot_dimension_numbers<[1], [0], [0], [1], [0, 0, 1, 1], [], []>} : vector<4x64xbf16>, vector<64x128xbf16>, vector<4x128xf32> -> vector<4x128xf32>
    %167 = arith.addf %166, %42 : vector<4x128xf32>
    %168 = arith.negf %167 : vector<4x128xf32>
    %169 = math.exp %168 : vector<4x128xf32>
    %cst_27 = arith.constant 1.000000e+00 : f32
    %170 = vector.broadcast %cst_27 : f32 to vector<4x128xf32>
    %171 = arith.addf %170, %169 : vector<4x128xf32>
    %172 = arith.divf %170, %171 : vector<4x128xf32>
    %173 = math.tanh %167 : vector<4x128xf32>
    %174 = vector.extract_strided_slice %172 {offsets = [0, 0], sizes = [4, 32], strides = [1, 1]} : vector<4x128xf32> to vector<4x32xf32>
    %175 = vector.extract_strided_slice %172 {offsets = [0, 32], sizes = [4, 32], strides = [1, 1]} : vector<4x128xf32> to vector<4x32xf32>
    %176 = vector.extract_strided_slice %173 {offsets = [0, 64], sizes = [4, 32], strides = [1, 1]} : vector<4x128xf32> to vector<4x32xf32>
    %177 = vector.extract_strided_slice %172 {offsets = [0, 96], sizes = [4, 32], strides = [1, 1]} : vector<4x128xf32> to vector<4x32xf32>
    %178 = arith.mulf %175, %154 : vector<4x32xf32>
    %179 = arith.mulf %174, %176 : vector<4x32xf32>
    %180 = arith.addf %178, %179 : vector<4x32xf32>
    %181 = math.tanh %180 : vector<4x32xf32>
    %182 = arith.mulf %177, %181 : vector<4x32xf32>
    %183 = vector.broadcast %57 : vector<4x1xf32> to vector<4x32xf32>
    %184 = arith.mulf %182, %183 : vector<4x32xf32>
    %185 = vector.broadcast %59 : vector<4x1xf32> to vector<4x32xf32>
    %186 = arith.mulf %182, %185 : vector<4x32xf32>
    %187 = tpu.concatenate %184, %186 in 1 : vector<4x32xf32>, vector<4x32xf32> -> vector<4x64xf32>
    %188 = arith.truncf %187 : vector<4x64xf32> to vector<4x64xbf16>
    %cst_28 = arith.constant dense<0.000000e+00> : vector<4x8xf32>
    %189 = tpu.matmul %188, %6, %cst_28 {dimension_numbers = #tpu.dot_dimension_numbers<[1], [0], [0], [1], [0, 0, 1, 1], [], []>} : vector<4x64xbf16>, vector<64x8xbf16>, vector<4x8xf32> -> vector<4x8xf32>
    %190 = vector.extract_strided_slice %189 {offsets = [0, 0], sizes = [2, 8], strides = [1, 1]} : vector<4x8xf32> to vector<2x8xf32>
    %191 = vector.extract_strided_slice %189 {offsets = [2, 0], sizes = [2, 8], strides = [1, 1]} : vector<4x8xf32> to vector<2x8xf32>
    %cst_29 = arith.constant dense<0.000000e+00> : vector<4x128xf32>
    %192 = tpu.matmul %188, %3, %cst_29 {dimension_numbers = #tpu.dot_dimension_numbers<[1], [0], [0], [1], [0, 0, 1, 1], [], []>} : vector<4x64xbf16>, vector<64x128xbf16>, vector<4x128xf32> -> vector<4x128xf32>
    %193 = arith.addf %192, %45 : vector<4x128xf32>
    %194 = arith.negf %193 : vector<4x128xf32>
    %195 = math.exp %194 : vector<4x128xf32>
    %cst_30 = arith.constant 1.000000e+00 : f32
    %196 = vector.broadcast %cst_30 : f32 to vector<4x128xf32>
    %197 = arith.addf %196, %195 : vector<4x128xf32>
    %198 = arith.divf %196, %197 : vector<4x128xf32>
    %199 = math.tanh %193 : vector<4x128xf32>
    %200 = vector.extract_strided_slice %198 {offsets = [0, 0], sizes = [4, 32], strides = [1, 1]} : vector<4x128xf32> to vector<4x32xf32>
    %201 = vector.extract_strided_slice %198 {offsets = [0, 32], sizes = [4, 32], strides = [1, 1]} : vector<4x128xf32> to vector<4x32xf32>
    %202 = vector.extract_strided_slice %199 {offsets = [0, 64], sizes = [4, 32], strides = [1, 1]} : vector<4x128xf32> to vector<4x32xf32>
    %203 = vector.extract_strided_slice %198 {offsets = [0, 96], sizes = [4, 32], strides = [1, 1]} : vector<4x128xf32> to vector<4x32xf32>
    %204 = arith.mulf %201, %180 : vector<4x32xf32>
    %205 = arith.mulf %200, %202 : vector<4x32xf32>
    %206 = arith.addf %204, %205 : vector<4x32xf32>
    %207 = math.tanh %206 : vector<4x32xf32>
    %208 = arith.mulf %203, %207 : vector<4x32xf32>
    %209 = vector.broadcast %57 : vector<4x1xf32> to vector<4x32xf32>
    %210 = arith.mulf %208, %209 : vector<4x32xf32>
    %211 = vector.broadcast %59 : vector<4x1xf32> to vector<4x32xf32>
    %212 = arith.mulf %208, %211 : vector<4x32xf32>
    %213 = tpu.concatenate %210, %212 in 1 : vector<4x32xf32>, vector<4x32xf32> -> vector<4x64xf32>
    %214 = arith.truncf %213 : vector<4x64xf32> to vector<4x64xbf16>
    %cst_31 = arith.constant dense<0.000000e+00> : vector<4x8xf32>
    %215 = tpu.matmul %214, %6, %cst_31 {dimension_numbers = #tpu.dot_dimension_numbers<[1], [0], [0], [1], [0, 0, 1, 1], [], []>} : vector<4x64xbf16>, vector<64x8xbf16>, vector<4x8xf32> -> vector<4x8xf32>
    %216 = vector.extract_strided_slice %215 {offsets = [0, 0], sizes = [2, 8], strides = [1, 1]} : vector<4x8xf32> to vector<2x8xf32>
    %217 = vector.extract_strided_slice %215 {offsets = [2, 0], sizes = [2, 8], strides = [1, 1]} : vector<4x8xf32> to vector<2x8xf32>
    %cst_32 = arith.constant dense<0.000000e+00> : vector<4x128xf32>
    %218 = tpu.matmul %214, %3, %cst_32 {dimension_numbers = #tpu.dot_dimension_numbers<[1], [0], [0], [1], [0, 0, 1, 1], [], []>} : vector<4x64xbf16>, vector<64x128xbf16>, vector<4x128xf32> -> vector<4x128xf32>
    %219 = arith.addf %218, %48 : vector<4x128xf32>
    %220 = arith.negf %219 : vector<4x128xf32>
    %221 = math.exp %220 : vector<4x128xf32>
    %cst_33 = arith.constant 1.000000e+00 : f32
    %222 = vector.broadcast %cst_33 : f32 to vector<4x128xf32>
    %223 = arith.addf %222, %221 : vector<4x128xf32>
    %224 = arith.divf %222, %223 : vector<4x128xf32>
    %225 = math.tanh %219 : vector<4x128xf32>
    %226 = vector.extract_strided_slice %224 {offsets = [0, 0], sizes = [4, 32], strides = [1, 1]} : vector<4x128xf32> to vector<4x32xf32>
    %227 = vector.extract_strided_slice %224 {offsets = [0, 32], sizes = [4, 32], strides = [1, 1]} : vector<4x128xf32> to vector<4x32xf32>
    %228 = vector.extract_strided_slice %225 {offsets = [0, 64], sizes = [4, 32], strides = [1, 1]} : vector<4x128xf32> to vector<4x32xf32>
    %229 = vector.extract_strided_slice %224 {offsets = [0, 96], sizes = [4, 32], strides = [1, 1]} : vector<4x128xf32> to vector<4x32xf32>
    %230 = arith.mulf %227, %206 : vector<4x32xf32>
    %231 = arith.mulf %226, %228 : vector<4x32xf32>
    %232 = arith.addf %230, %231 : vector<4x32xf32>
    %233 = math.tanh %232 : vector<4x32xf32>
    %234 = arith.mulf %229, %233 : vector<4x32xf32>
    %235 = vector.broadcast %57 : vector<4x1xf32> to vector<4x32xf32>
    %236 = arith.mulf %234, %235 : vector<4x32xf32>
    %237 = vector.broadcast %59 : vector<4x1xf32> to vector<4x32xf32>
    %238 = arith.mulf %234, %237 : vector<4x32xf32>
    %239 = tpu.concatenate %236, %238 in 1 : vector<4x32xf32>, vector<4x32xf32> -> vector<4x64xf32>
    %240 = arith.truncf %239 : vector<4x64xf32> to vector<4x64xbf16>
    %cst_34 = arith.constant dense<0.000000e+00> : vector<4x8xf32>
    %241 = tpu.matmul %240, %6, %cst_34 {dimension_numbers = #tpu.dot_dimension_numbers<[1], [0], [0], [1], [0, 0, 1, 1], [], []>} : vector<4x64xbf16>, vector<64x8xbf16>, vector<4x8xf32> -> vector<4x8xf32>
    %242 = vector.extract_strided_slice %241 {offsets = [0, 0], sizes = [2, 8], strides = [1, 1]} : vector<4x8xf32> to vector<2x8xf32>
    %243 = vector.extract_strided_slice %241 {offsets = [2, 0], sizes = [2, 8], strides = [1, 1]} : vector<4x8xf32> to vector<2x8xf32>
    %cst_35 = arith.constant dense<0.000000e+00> : vector<4x128xf32>
    %244 = tpu.matmul %240, %3, %cst_35 {dimension_numbers = #tpu.dot_dimension_numbers<[1], [0], [0], [1], [0, 0, 1, 1], [], []>} : vector<4x64xbf16>, vector<64x128xbf16>, vector<4x128xf32> -> vector<4x128xf32>
    %245 = arith.addf %244, %51 : vector<4x128xf32>
    %246 = arith.negf %245 : vector<4x128xf32>
    %247 = math.exp %246 : vector<4x128xf32>
    %cst_36 = arith.constant 1.000000e+00 : f32
    %248 = vector.broadcast %cst_36 : f32 to vector<4x128xf32>
    %249 = arith.addf %248, %247 : vector<4x128xf32>
    %250 = arith.divf %248, %249 : vector<4x128xf32>
    %251 = math.tanh %245 : vector<4x128xf32>
    %252 = vector.extract_strided_slice %250 {offsets = [0, 0], sizes = [4, 32], strides = [1, 1]} : vector<4x128xf32> to vector<4x32xf32>
    %253 = vector.extract_strided_slice %250 {offsets = [0, 32], sizes = [4, 32], strides = [1, 1]} : vector<4x128xf32> to vector<4x32xf32>
    %254 = vector.extract_strided_slice %251 {offsets = [0, 64], sizes = [4, 32], strides = [1, 1]} : vector<4x128xf32> to vector<4x32xf32>
    %255 = vector.extract_strided_slice %250 {offsets = [0, 96], sizes = [4, 32], strides = [1, 1]} : vector<4x128xf32> to vector<4x32xf32>
    %256 = arith.mulf %253, %232 : vector<4x32xf32>
    %257 = arith.mulf %252, %254 : vector<4x32xf32>
    %258 = arith.addf %256, %257 : vector<4x32xf32>
    %259 = math.tanh %258 : vector<4x32xf32>
    %260 = arith.mulf %255, %259 : vector<4x32xf32>
    %261 = vector.broadcast %57 : vector<4x1xf32> to vector<4x32xf32>
    %262 = arith.mulf %260, %261 : vector<4x32xf32>
    %263 = vector.broadcast %59 : vector<4x1xf32> to vector<4x32xf32>
    %264 = arith.mulf %260, %263 : vector<4x32xf32>
    %265 = tpu.concatenate %262, %264 in 1 : vector<4x32xf32>, vector<4x32xf32> -> vector<4x64xf32>
    %266 = arith.truncf %265 : vector<4x64xf32> to vector<4x64xbf16>
    %cst_37 = arith.constant dense<0.000000e+00> : vector<4x8xf32>
    %267 = tpu.matmul %266, %6, %cst_37 {dimension_numbers = #tpu.dot_dimension_numbers<[1], [0], [0], [1], [0, 0, 1, 1], [], []>} : vector<4x64xbf16>, vector<64x8xbf16>, vector<4x8xf32> -> vector<4x8xf32>
    %268 = vector.extract_strided_slice %267 {offsets = [0, 0], sizes = [2, 8], strides = [1, 1]} : vector<4x8xf32> to vector<2x8xf32>
    %269 = vector.extract_strided_slice %267 {offsets = [2, 0], sizes = [2, 8], strides = [1, 1]} : vector<4x8xf32> to vector<2x8xf32>
    %270 = tpu.iota {dimensions = array<i32: 1>} : vector<2x8x8xi32>
    %271 = arith.addf %86, %269 : vector<2x8xf32>
    %272 = vector.broadcast %9 : vector<1x8xf32> to vector<2x8xf32>
    %273 = arith.addf %271, %272 : vector<2x8xf32>
    %274 = vector.broadcast %10 : vector<1x8xf32> to vector<2x8xf32>
    %275 = arith.addf %274, %273 : vector<2x8xf32>
    %c0_i32_38 = arith.constant 0 : i32
    %276 = vector.broadcast %c0_i32_38 : i32 to vector<2x8xi32>
    %277 = arith.addf %112, %243 : vector<2x8xf32>
    %278 = vector.broadcast %9 : vector<1x8xf32> to vector<2x8xf32>
    %279 = arith.addf %277, %278 : vector<2x8xf32>
    %280 = vector.shape_cast %275 : vector<2x8xf32> to vector<2x8x1xf32>
    %281 = vector.broadcast %280 : vector<2x8x1xf32> to vector<2x8x8xf32>
    %282 = vector.broadcast %14 : vector<1x8x8xf32> to vector<2x8x8xf32>
    %283 = arith.addf %281, %282 : vector<2x8x8xf32>
    %284 = vector.shape_cast %279 : vector<2x8xf32> to vector<2x1x8xf32>
    %285 = vector.broadcast %284 : vector<2x1x8xf32> to vector<2x8x8xf32>
    %286 = arith.addf %283, %285 : vector<2x8x8xf32>
    %cst_39 = arith.constant dense<0xFF800000> : vector<2x8xf32>
    %287 = vector.multi_reduction <maximumf>, %286, %cst_39 [1] : vector<2x8x8xf32> to vector<2x8xf32>
    %288 = vector.shape_cast %287 : vector<2x8xf32> to vector<2x1x8xf32>
    %289 = vector.broadcast %288 : vector<2x1x8xf32> to vector<2x8x8xf32>
    %290 = arith.cmpf oeq, %286, %289 : vector<2x8x8xf32>
    %c8_i32 = arith.constant 8 : i32
    %291 = vector.broadcast %c8_i32 : i32 to vector<2x8x8xi32>
    %292 = arith.select %290, %270, %291 : vector<2x8x8xi1>, vector<2x8x8xi32>
    %cst_40 = arith.constant dense<2147483647> : vector<2x8xi32>
    %293 = vector.multi_reduction <minsi>, %292, %cst_40 [1] : vector<2x8x8xi32> to vector<2x8xi32>
    %294 = vector.extract_strided_slice %19 {offsets = [2, 0], sizes = [2, 1], strides = [1, 1]} : vector<16x1xi1> to vector<2x1xi1>
    %295 = vector.shape_cast %294 : vector<2x1xi1> to vector<2x1xi1>
    %296 = vector.broadcast %295 : vector<2x1xi1> to vector<2x8xi1>
    %297 = arith.select %296, %287, %275 : vector<2x8xi1>, vector<2x8xf32>
    %298 = arith.addf %138, %217 : vector<2x8xf32>
    %299 = vector.broadcast %9 : vector<1x8xf32> to vector<2x8xf32>
    %300 = arith.addf %298, %299 : vector<2x8xf32>
    %301 = vector.shape_cast %297 : vector<2x8xf32> to vector<2x8x1xf32>
    %302 = vector.broadcast %301 : vector<2x8x1xf32> to vector<2x8x8xf32>
    %303 = vector.broadcast %14 : vector<1x8x8xf32> to vector<2x8x8xf32>
    %304 = arith.addf %302, %303 : vector<2x8x8xf32>
    %305 = vector.shape_cast %300 : vector<2x8xf32> to vector<2x1x8xf32>
    %306 = vector.broadcast %305 : vector<2x1x8xf32> to vector<2x8x8xf32>
    %307 = arith.addf %304, %306 : vector<2x8x8xf32>
    %cst_41 = arith.constant dense<0xFF800000> : vector<2x8xf32>
    %308 = vector.multi_reduction <maximumf>, %307, %cst_41 [1] : vector<2x8x8xf32> to vector<2x8xf32>
    %309 = vector.shape_cast %308 : vector<2x8xf32> to vector<2x1x8xf32>
    %310 = vector.broadcast %309 : vector<2x1x8xf32> to vector<2x8x8xf32>
    %311 = arith.cmpf oeq, %307, %310 : vector<2x8x8xf32>
    %c8_i32_42 = arith.constant 8 : i32
    %312 = vector.broadcast %c8_i32_42 : i32 to vector<2x8x8xi32>
    %313 = arith.select %311, %270, %312 : vector<2x8x8xi1>, vector<2x8x8xi32>
    %cst_43 = arith.constant dense<2147483647> : vector<2x8xi32>
    %314 = vector.multi_reduction <minsi>, %313, %cst_43 [1] : vector<2x8x8xi32> to vector<2x8xi32>
    %315 = vector.extract_strided_slice %19 {offsets = [4, 0], sizes = [2, 1], strides = [1, 1]} : vector<16x1xi1> to vector<2x1xi1>
    %316 = vector.shape_cast %315 : vector<2x1xi1> to vector<2x1xi1>
    %317 = vector.broadcast %316 : vector<2x1xi1> to vector<2x8xi1>
    %318 = arith.select %317, %308, %297 : vector<2x8xi1>, vector<2x8xf32>
    %319 = arith.addf %164, %191 : vector<2x8xf32>
    %320 = vector.broadcast %9 : vector<1x8xf32> to vector<2x8xf32>
    %321 = arith.addf %319, %320 : vector<2x8xf32>
    %322 = vector.shape_cast %318 : vector<2x8xf32> to vector<2x8x1xf32>
    %323 = vector.broadcast %322 : vector<2x8x1xf32> to vector<2x8x8xf32>
    %324 = vector.broadcast %14 : vector<1x8x8xf32> to vector<2x8x8xf32>
    %325 = arith.addf %323, %324 : vector<2x8x8xf32>
    %326 = vector.shape_cast %321 : vector<2x8xf32> to vector<2x1x8xf32>
    %327 = vector.broadcast %326 : vector<2x1x8xf32> to vector<2x8x8xf32>
    %328 = arith.addf %325, %327 : vector<2x8x8xf32>
    %cst_44 = arith.constant dense<0xFF800000> : vector<2x8xf32>
    %329 = vector.multi_reduction <maximumf>, %328, %cst_44 [1] : vector<2x8x8xf32> to vector<2x8xf32>
    %330 = vector.shape_cast %329 : vector<2x8xf32> to vector<2x1x8xf32>
    %331 = vector.broadcast %330 : vector<2x1x8xf32> to vector<2x8x8xf32>
    %332 = arith.cmpf oeq, %328, %331 : vector<2x8x8xf32>
    %c8_i32_45 = arith.constant 8 : i32
    %333 = vector.broadcast %c8_i32_45 : i32 to vector<2x8x8xi32>
    %334 = arith.select %332, %270, %333 : vector<2x8x8xi1>, vector<2x8x8xi32>
    %cst_46 = arith.constant dense<2147483647> : vector<2x8xi32>
    %335 = vector.multi_reduction <minsi>, %334, %cst_46 [1] : vector<2x8x8xi32> to vector<2x8xi32>
    %336 = vector.extract_strided_slice %19 {offsets = [6, 0], sizes = [2, 1], strides = [1, 1]} : vector<16x1xi1> to vector<2x1xi1>
    %337 = vector.shape_cast %336 : vector<2x1xi1> to vector<2x1xi1>
    %338 = vector.broadcast %337 : vector<2x1xi1> to vector<2x8xi1>
    %339 = arith.select %338, %329, %318 : vector<2x8xi1>, vector<2x8xf32>
    %340 = arith.addf %190, %165 : vector<2x8xf32>
    %341 = vector.broadcast %9 : vector<1x8xf32> to vector<2x8xf32>
    %342 = arith.addf %340, %341 : vector<2x8xf32>
    %343 = vector.shape_cast %339 : vector<2x8xf32> to vector<2x8x1xf32>
    %344 = vector.broadcast %343 : vector<2x8x1xf32> to vector<2x8x8xf32>
    %345 = vector.broadcast %14 : vector<1x8x8xf32> to vector<2x8x8xf32>
    %346 = arith.addf %344, %345 : vector<2x8x8xf32>
    %347 = vector.shape_cast %342 : vector<2x8xf32> to vector<2x1x8xf32>
    %348 = vector.broadcast %347 : vector<2x1x8xf32> to vector<2x8x8xf32>
    %349 = arith.addf %346, %348 : vector<2x8x8xf32>
    %cst_47 = arith.constant dense<0xFF800000> : vector<2x8xf32>
    %350 = vector.multi_reduction <maximumf>, %349, %cst_47 [1] : vector<2x8x8xf32> to vector<2x8xf32>
    %351 = vector.shape_cast %350 : vector<2x8xf32> to vector<2x1x8xf32>
    %352 = vector.broadcast %351 : vector<2x1x8xf32> to vector<2x8x8xf32>
    %353 = arith.cmpf oeq, %349, %352 : vector<2x8x8xf32>
    %c8_i32_48 = arith.constant 8 : i32
    %354 = vector.broadcast %c8_i32_48 : i32 to vector<2x8x8xi32>
    %355 = arith.select %353, %270, %354 : vector<2x8x8xi1>, vector<2x8x8xi32>
    %cst_49 = arith.constant dense<2147483647> : vector<2x8xi32>
    %356 = vector.multi_reduction <minsi>, %355, %cst_49 [1] : vector<2x8x8xi32> to vector<2x8xi32>
    %357 = vector.extract_strided_slice %19 {offsets = [8, 0], sizes = [2, 1], strides = [1, 1]} : vector<16x1xi1> to vector<2x1xi1>
    %358 = vector.shape_cast %357 : vector<2x1xi1> to vector<2x1xi1>
    %359 = vector.broadcast %358 : vector<2x1xi1> to vector<2x8xi1>
    %360 = arith.select %359, %350, %339 : vector<2x8xi1>, vector<2x8xf32>
    %361 = arith.addf %216, %139 : vector<2x8xf32>
    %362 = vector.broadcast %9 : vector<1x8xf32> to vector<2x8xf32>
    %363 = arith.addf %361, %362 : vector<2x8xf32>
    %364 = vector.shape_cast %360 : vector<2x8xf32> to vector<2x8x1xf32>
    %365 = vector.broadcast %364 : vector<2x8x1xf32> to vector<2x8x8xf32>
    %366 = vector.broadcast %14 : vector<1x8x8xf32> to vector<2x8x8xf32>
    %367 = arith.addf %365, %366 : vector<2x8x8xf32>
    %368 = vector.shape_cast %363 : vector<2x8xf32> to vector<2x1x8xf32>
    %369 = vector.broadcast %368 : vector<2x1x8xf32> to vector<2x8x8xf32>
    %370 = arith.addf %367, %369 : vector<2x8x8xf32>
    %cst_50 = arith.constant dense<0xFF800000> : vector<2x8xf32>
    %371 = vector.multi_reduction <maximumf>, %370, %cst_50 [1] : vector<2x8x8xf32> to vector<2x8xf32>
    %372 = vector.shape_cast %371 : vector<2x8xf32> to vector<2x1x8xf32>
    %373 = vector.broadcast %372 : vector<2x1x8xf32> to vector<2x8x8xf32>
    %374 = arith.cmpf oeq, %370, %373 : vector<2x8x8xf32>
    %c8_i32_51 = arith.constant 8 : i32
    %375 = vector.broadcast %c8_i32_51 : i32 to vector<2x8x8xi32>
    %376 = arith.select %374, %270, %375 : vector<2x8x8xi1>, vector<2x8x8xi32>
    %cst_52 = arith.constant dense<2147483647> : vector<2x8xi32>
    %377 = vector.multi_reduction <minsi>, %376, %cst_52 [1] : vector<2x8x8xi32> to vector<2x8xi32>
    %378 = vector.extract_strided_slice %19 {offsets = [10, 0], sizes = [2, 1], strides = [1, 1]} : vector<16x1xi1> to vector<2x1xi1>
    %379 = vector.shape_cast %378 : vector<2x1xi1> to vector<2x1xi1>
    %380 = vector.broadcast %379 : vector<2x1xi1> to vector<2x8xi1>
    %381 = arith.select %380, %371, %360 : vector<2x8xi1>, vector<2x8xf32>
    %382 = arith.addf %242, %113 : vector<2x8xf32>
    %383 = vector.broadcast %9 : vector<1x8xf32> to vector<2x8xf32>
    %384 = arith.addf %382, %383 : vector<2x8xf32>
    %385 = vector.shape_cast %381 : vector<2x8xf32> to vector<2x8x1xf32>
    %386 = vector.broadcast %385 : vector<2x8x1xf32> to vector<2x8x8xf32>
    %387 = vector.broadcast %14 : vector<1x8x8xf32> to vector<2x8x8xf32>
    %388 = arith.addf %386, %387 : vector<2x8x8xf32>
    %389 = vector.shape_cast %384 : vector<2x8xf32> to vector<2x1x8xf32>
    %390 = vector.broadcast %389 : vector<2x1x8xf32> to vector<2x8x8xf32>
    %391 = arith.addf %388, %390 : vector<2x8x8xf32>
    %cst_53 = arith.constant dense<0xFF800000> : vector<2x8xf32>
    %392 = vector.multi_reduction <maximumf>, %391, %cst_53 [1] : vector<2x8x8xf32> to vector<2x8xf32>
    %393 = vector.shape_cast %392 : vector<2x8xf32> to vector<2x1x8xf32>
    %394 = vector.broadcast %393 : vector<2x1x8xf32> to vector<2x8x8xf32>
    %395 = arith.cmpf oeq, %391, %394 : vector<2x8x8xf32>
    %c8_i32_54 = arith.constant 8 : i32
    %396 = vector.broadcast %c8_i32_54 : i32 to vector<2x8x8xi32>
    %397 = arith.select %395, %270, %396 : vector<2x8x8xi1>, vector<2x8x8xi32>
    %cst_55 = arith.constant dense<2147483647> : vector<2x8xi32>
    %398 = vector.multi_reduction <minsi>, %397, %cst_55 [1] : vector<2x8x8xi32> to vector<2x8xi32>
    %399 = vector.extract_strided_slice %19 {offsets = [12, 0], sizes = [2, 1], strides = [1, 1]} : vector<16x1xi1> to vector<2x1xi1>
    %400 = vector.shape_cast %399 : vector<2x1xi1> to vector<2x1xi1>
    %401 = vector.broadcast %400 : vector<2x1xi1> to vector<2x8xi1>
    %402 = arith.select %401, %392, %381 : vector<2x8xi1>, vector<2x8xf32>
    %403 = arith.addf %268, %87 : vector<2x8xf32>
    %404 = vector.broadcast %9 : vector<1x8xf32> to vector<2x8xf32>
    %405 = arith.addf %403, %404 : vector<2x8xf32>
    %406 = vector.shape_cast %402 : vector<2x8xf32> to vector<2x8x1xf32>
    %407 = vector.broadcast %406 : vector<2x8x1xf32> to vector<2x8x8xf32>
    %408 = vector.broadcast %14 : vector<1x8x8xf32> to vector<2x8x8xf32>
    %409 = arith.addf %407, %408 : vector<2x8x8xf32>
    %410 = vector.shape_cast %405 : vector<2x8xf32> to vector<2x1x8xf32>
    %411 = vector.broadcast %410 : vector<2x1x8xf32> to vector<2x8x8xf32>
    %412 = arith.addf %409, %411 : vector<2x8x8xf32>
    %cst_56 = arith.constant dense<0xFF800000> : vector<2x8xf32>
    %413 = vector.multi_reduction <maximumf>, %412, %cst_56 [1] : vector<2x8x8xf32> to vector<2x8xf32>
    %414 = vector.shape_cast %413 : vector<2x8xf32> to vector<2x1x8xf32>
    %415 = vector.broadcast %414 : vector<2x1x8xf32> to vector<2x8x8xf32>
    %416 = arith.cmpf oeq, %412, %415 : vector<2x8x8xf32>
    %c8_i32_57 = arith.constant 8 : i32
    %417 = vector.broadcast %c8_i32_57 : i32 to vector<2x8x8xi32>
    %418 = arith.select %416, %270, %417 : vector<2x8x8xi1>, vector<2x8x8xi32>
    %cst_58 = arith.constant dense<2147483647> : vector<2x8xi32>
    %419 = vector.multi_reduction <minsi>, %418, %cst_58 [1] : vector<2x8x8xi32> to vector<2x8xi32>
    %420 = vector.extract_strided_slice %19 {offsets = [14, 0], sizes = [2, 1], strides = [1, 1]} : vector<16x1xi1> to vector<2x1xi1>
    %421 = vector.shape_cast %420 : vector<2x1xi1> to vector<2x1xi1>
    %422 = vector.broadcast %421 : vector<2x1xi1> to vector<2x8xi1>
    %423 = arith.select %422, %413, %402 : vector<2x8xi1>, vector<2x8xf32>
    %424 = vector.broadcast %11 : vector<1x8xf32> to vector<2x8xf32>
    %425 = arith.addf %423, %424 : vector<2x8xf32>
    %c0_59 = arith.constant 0 : index
    %c0_60 = arith.constant 0 : index
    %426 = vector.load %arg2[%c0_59, %c0_60] : memref<2x8xf32, #tpu.memory_space<vmem>>, vector<2x8xf32>
    tpu.vector_store %arg2[%c0_59, %c0_60], %425 {strides = array<i32>} : memref<2x8xf32, #tpu.memory_space<vmem>>, vector<2x8xf32>,
    %427 = tpu.concatenate %276, %293, %314, %335, %356, %377, %398, %419 in 0 : vector<2x8xi32>, vector<2x8xi32>, vector<2x8xi32>, vector<2x8xi32>, vector<2x8xi32>, vector<2x8xi32>, vector<2x8xi32>, vector<2x8xi32> -> vector<16x8xi32>
    %c0_61 = arith.constant 0 : index
    %c0_62 = arith.constant 0 : index
    %428 = vector.load %arg3[%c0_61, %c0_62] : memref<16x8xi32, #tpu.memory_space<vmem>>, vector<16x8xi32>
    tpu.vector_store %arg3[%c0_61, %c0_62], %427 {strides = array<i32>} : memref<16x8xi32, #tpu.memory_space<vmem>>, vector<16x8xi32>,
    return
  }
}

</mosaic_0001>

<llo_original>
// kernel: model_forward.1
$region0: #{model_forward.1}
  #allocation0 [shape = 'u32[]', space=smem, size = 0x4, offset = 0x4, fixed_abs, tag = 'smem constant byte address 0x4 - core index']
  #allocation1 [shape = 'u32[144,128]{1,0:T(1,128)}', space=vmem, size = 0x12000, scoped, tag = 'internal scratch']
  %s0 = inlined_call_operand.vmem [shape: s32[16,2], index: 0, kind: input, shape index: {}]
  %s1 = inlined_call_operand.vmem [shape: f32[176,256], index: 1, kind: input, shape index: {}]
  %s2 = inlined_call_operand.hbm [shape: f32[2,8], index: 2, kind: output, shape index: {0}]
  %s3 = inlined_call_operand.vmem [shape: s32[16,8], index: 3, kind: output, shape index: {1}]
  %4 = xla_tuple %s2, %s3
  %s5 = sld [smem:[#allocation0]]
  $region26: #{model_forward.1} parent=0
    _
  %s7 = ssub.s32 1, %s5
  %s8 = scalar_select 0, %s7, %s5
  $region1: #{model_forward.1} parent=0
    #allocation2 [shape = 'u8[1024]{0}', space=vmem, size = 0x400, scoped, tag = 'output window, operand 0, single buffered']
    #allocation3 [shape = 's32[1]{0}', space=sflag, size = 0x4, scoped, tag = 'scoped memory for model_forward.1']
    %9 = vsyncpa [#allocation3], 0
    // Predicated region
    $region2: #{model_forward.1} parent=1 // pred_check
      _
    $region3: #{model_forward.1} parent=1 // pred_check_branch
      %11 = sbr.rel (0) target = $region5
    $region4: #{model_forward.1} parent=1 // pred_region
      _
    $region5: #{model_forward.1} parent=1 // pred_fallthru
      _
    // Predicated region
    $region6: #{model_forward.1} parent=1 // pred_check
      _
    $region7: #{model_forward.1} parent=1 // pred_check_branch
      %13 = sbr.rel (0) target = $region9
    $region8: #{model_forward.1} parent=1 // pred_region
      _
    $region9: #{model_forward.1} parent=1 // pred_fallthru
      _
    %v15 = vld [vmem:[%s1] sm:$0xff]
    %v16 = vld [vmem:[%s1 + $0x8] sm:$0xff]
    %v17 = vld [vmem:[%s1 + $0x10] sm:$0xff]
    %v18 = vld [vmem:[%s1 + $0x18] sm:$0xff]
    %v19 = vld [vmem:[%s1 + $0x20] sm:$0xff]
    %v20 = vld [vmem:[%s1 + $0x28] sm:$0xff]
    %v21 = vld [vmem:[%s1 + $0x30] sm:$0xff]
    %v22 = vld [vmem:[%s1 + $0x38] sm:$0xff]
    %v23 = vpack.c.bf16 %v17, %v15
    %v24 = vpack.c.bf16 %v18, %v16
    %v25 = vpack.c.bf16 %v21, %v19
    %v26 = vpack.c.bf16 %v22, %v20
    %v27 = vld [vmem:[%s1 + $0x40] sm:$0xff]
    %v28 = vld [vmem:[%s1 + $0x50] sm:$0xff]
    %v29 = vld [vmem:[%s1 + $0x60] sm:$0xff]
    %v30 = vld [vmem:[%s1 + $0x70] sm:$0xff]
    %v31 = vld [vmem:[%s1 + $0x80] sm:$0xff]
    %v32 = vld [vmem:[%s1 + $0x90] sm:$0xff]
    %v33 = vld [vmem:[%s1 + $0xa0] sm:$0xff]
    %v34 = vld [vmem:[%s1 + $0xb0] sm:$0xff]
    %v35 = vpack.c.bf16 %v28, %v27
    %v36 = vpack.c.bf16 %v30, %v29
    %v37 = vpack.c.bf16 %v32, %v31
    %v38 = vpack.c.bf16 %v34, %v33
    %v39 = vld [vmem:[%s1 + $0xc0] sm:$0xff]
    %v40 = vld [vmem:[%s1 + $0xd0] sm:$0xff]
    %v41 = vld [vmem:[%s1 + $0xe0] sm:$0xff]
    %v42 = vld [vmem:[%s1 + $0xf0] sm:$0xff]
    %v43 = vld [vmem:[%s1 + $0x100] sm:$0xff]
    %v44 = vld [vmem:[%s1 + $0x110] sm:$0xff]
    %v45 = vld [vmem:[%s1 + $0x120] sm:$0xff]
    %v46 = vld [vmem:[%s1 + $0x130] sm:$0xff]
    %v47 = vpack.c.bf16 %v40, %v39
    %v48 = vpack.c.bf16 %v42, %v41
    %v49 = vpack.c.bf16 %v44, %v43
    %v50 = vpack.c.bf16 %v46, %v45
    %v51 = vld [vmem:[%s1 + $0x140] sm:$0xff]
    %v52 = vld [vmem:[%s1 + $0x150] sm:$0xff]
    %v53 = vld [vmem:[%s0] sm:$0xff]
    %v54 = vld [vmem:[%s0 + $0x8] sm:$0xff]
    %vm55 = vcmp.gt.s32.totalorder %v53, 0
    %vm56 = vcmp.gt.s32.totalorder %v54, 0
    %v57 = vlaneseq
    %v58 = vand.u32 %v57, 127
    %59 = vset.pattern.permute.xlu0 0
    %60 = vperm.xlu0 %59, %v53
    %v61 = vpop.permute.xlu0 %60
    %62 = vset.pattern.permute.xlu0 0
    %63 = vperm.xlu0 %62, %v54
    %v64 = vpop.permute.xlu0 %63
    %vm65 = vcmp.eq.s32.totalorder %v61, %v58
    %vm66 = vcmp.eq.s32.totalorder %v64, %v58
    %v67 = vsel %vm65, 1.0, 0.0
    %v68 = vsel %vm66, 1.0, 0.0
    %v69 = vpack.c.bf16 %v68, %v67
    %vm70 = vcmask 261120
    %v72 = vsel %vm70, %v69, 0
    %74 = vmatprep.subr.bf16.mxu0 %v24
    %75 = vmatpush1.bf16.msra.mxu0 %v23
    %76 = vmatprep.subr.bf16.mxu0 %v26
    %77 = vmatpush1.bf16.msra.mxu0 %v25
    %78 = vmatprep.subr.bf16.mxu0 0
    %79 = vmatpush1.bf16.msra.mxu0 0
    %80 = vmatprep.subr.bf16.mxu0 0
    %81 = vmatpush1.bf16.msra.mxu0 0
    %82 = vmatprep.subr.bf16.mxu0 0
    %83 = vmatpush1.bf16.msra.mxu0 0
    %84 = vmatprep.subr.bf16.mxu0 0
    %85 = vmatpush1.bf16.msra.mxu0 0
    %86 = vmatprep.subr.bf16.mxu0 0
    %87 = vmatpush1.bf16.msra.mxu0 0
    %88 = vmatprep.subr.bf16.mxu0 0
    %89 = vmatpush1.bf16.msra.mxu0 0
    %90 = vmatprep.subr.bf16.mxu0 0
    %91 = vmatpush1.bf16.msra.mxu0 0
    %92 = vmatprep.subr.bf16.mxu0 0
    %93 = vmatpush1.bf16.msra.mxu0 0
    %94 = vmatprep.subr.bf16.mxu0 0
    %95 = vmatpush1.bf16.msra.mxu0 0
    %96 = vmatprep.subr.bf16.mxu0 0
    %97 = vmatpush1.bf16.msra.mxu0 0
    %98 = vmatprep.subr.bf16.mxu0 0
    %99 = vmatpush1.bf16.msra.mxu0 0
    %100 = vmatprep.subr.bf16.mxu0 0
    %101 = vmatpush1.bf16.msra.mxu0 0
    %102 = vmatprep.subr.bf16.mxu0 0
    %103 = vmatpush1.bf16.msra.mxu0 0
    %104 = vmatprep.subr.bf16.mxu0 0
    %105 = vmatpush1.bf16.msra.mxu0 0
    %106 = vmatprep.mubr.bf16.mxu0 0
    %107 = vmatmul.mubr.bf16.gmra.mrb[0].mxu0 %v72
    %v108 = vpop.f32.mrb[0].mxu0
    %v109 = vadd.f32 0.0, %v108
    %v110 = vpop.f32.mrb[0].mxu0
    %v111 = vadd.f32 0.0, %v110
    %v112 = vpop.f32.mrb[0].mxu0
    %v113 = vadd.f32 0.0, %v112
    %v114 = vpop.f32.mrb[0].mxu0
    %v115 = vadd.f32 0.0, %v114
    %116 = vdwg.mxu0
    %v118 = vrot.slane %v115, 4
    %vm120 = vcmask 1041408
    %v121 = vsel %vm120, %v109, %v118
    %v123 = vrot.slane %v109, 2
    %v125 = vrot.slane %v115, 2
    %v127 = vsel %vm120, %v123, %v125
    %v128 = vrot.slane %v109, 4
    %v130 = vsel %vm120, %v128, %v115
    %v131 = vrot.slane %v109, 6
    %v133 = vrot.slane %v115, 6
    %v135 = vsel %vm120, %v131, %v133
    %v137 = vrot.slane %v111, 4
    %v139 = vsel %vm120, %v113, %v137
    %v141 = vrot.slane %v113, 2
    %v143 = vrot.slane %v111, 2
    %v145 = vsel %vm120, %v141, %v143
    %v146 = vrot.slane %v113, 4
    %v148 = vsel %vm120, %v146, %v111
    %v149 = vrot.slane %v113, 6
    %v151 = vrot.slane %v111, 6
    %v153 = vsel %vm120, %v149, %v151
    %v154 = vlaneseq
    %v155 = vshrl.u32 %v154, 7
    %vm156 = vcmp.lt.s32.totalorder %v155, 2
    %v157 = vsel %vm156, 1.0, 0.0
    %v158 = vsub.f32 1.0, %v157
    %vm159 = vcmask 523264
    %v161 = vsel %vm159, 0, 0
    %163 = vmatprep.subr.bf16.mxu0 0
    %164 = vmatpush1.bf16.msra.mxu0 %v35
    %165 = vmatprep.subr.bf16.mxu0 0
    %166 = vmatpush1.bf16.msra.mxu0 %v36
    %167 = vmatprep.subr.bf16.mxu0 0
    %168 = vmatpush1.bf16.msra.mxu0 %v37
    %169 = vmatprep.subr.bf16.mxu0 0
    %170 = vmatpush1.bf16.msra.mxu0 %v38
    %171 = vmatprep.subr.bf16.mxu0 0
    %172 = vmatpush1.bf16.msra.mxu0 0
    %173 = vmatprep.subr.bf16.mxu0 0
    %174 = vmatpush1.bf16.msra.mxu0 0
    %175 = vmatprep.subr.bf16.mxu0 0
    %176 = vmatpush1.bf16.msra.mxu0 0
    %177 = vmatprep.subr.bf16.mxu0 0
    %178 = vmatpush1.bf16.msra.mxu0 0
    %179 = vmatprep.subr.bf16.mxu0 0
    %180 = vmatpush1.bf16.msra.mxu0 0
    %181 = vmatprep.subr.bf16.mxu0 0
    %182 = vmatpush1.bf16.msra.mxu0 0
    %183 = vmatprep.subr.bf16.mxu0 0
    %184 = vmatpush1.bf16.msra.mxu0 0
    %185 = vmatprep.subr.bf16.mxu0 0
    %186 = vmatpush1.bf16.msra.mxu0 0
    %187 = vmatprep.subr.bf16.mxu0 0
    %188 = vmatpush1.bf16.msra.mxu0 0
    %189 = vmatprep.subr.bf16.mxu0 0
    %190 = vmatpush1.bf16.msra.mxu0 0
    %191 = vmatprep.subr.bf16.mxu0 0
    %192 = vmatpush1.bf16.msra.mxu0 0
    %193 = vmatprep.subr.bf16.mxu0 0
    %194 = vmatpush1.bf16.msra.mxu0 0
    %195 = vmatprep.mubr.bf16.mxu0 0
    %196 = vmatmul.mubr.bf16.gmra.mrb[0].mxu0 %v161
    %v197 = vpop.f32.mrb[0].mxu0
    %v198 = vadd.f32 %v121, %v197
    %v199 = vpop.f32.mrb[0].mxu0
    %v200 = vpop.f32.mrb[0].mxu0
    %v201 = vpop.f32.mrb[0].mxu0
    %202 = vdwg.mxu0
    %v203 = vxor.u32 %v198, 2147483648
    %v204 = vmul.f32 %v203, 1.442695
    %v205 = vpow.pop %v204
    %v206 = vadd.f32 %v205, 1.0
    %v207 = vrcp.pop %v206
    %v208 = vmul.f32 1.0, %v207
    %v209 = vtanh.pop %v198
    %v210 = vmul.f32 %v208, 0.0
    %212 = vrot.lane.b32.xlu0 %v209, 64
    %v213 = vpop.permute.xlu0 %212
    %v215 = vmul.f32 %v208, %v213
    %217 = vrot.lane.b32.xlu0 %v215, 32
    %v218 = vpop.permute.xlu0 %217
    %v220 = vadd.f32 %v210, %v218
    %v221 = vtanh.pop %v220
    %223 = vrot.lane.b32.xlu0 %v221, 64
    %v224 = vpop.permute.xlu0 %223
    %v226 = vmul.f32 %v208, %v224
    %v227 = vmul.f32 %v226, %v157
    %v228 = vmul.f32 %v226, %v158
    %230 = vrot.lane.b32.xlu0 %v227, 32
    %v231 = vpop.permute.xlu0 %230
    %234 = vrot.lane.b32.xlu0 %v228, 64
    %v235 = vpop.permute.xlu0 %234
    %v237 = vsel %vm70, %v231, %v235
    %v238 = vpack.c.bf16 %v237, %v237
    %v240 = vsel %vm159, %v238, 0
    %242 = vmatprep.subr.bf16.mxu0 0
    %243 = vmatpush1.bf16.msra.mxu0 %v47
    %244 = vmatprep.subr.bf16.mxu0 0
    %245 = vmatpush1.bf16.msra.mxu0 %v48
    %246 = vmatprep.subr.bf16.mxu0 0
    %247 = vmatpush1.bf16.msra.mxu0 %v49
    %248 = vmatprep.subr.bf16.mxu0 0
    %249 = vmatpush1.bf16.msra.mxu0 %v50
    %250 = vmatprep.subr.bf16.mxu0 0
    %251 = vmatpush1.bf16.msra.mxu0 0
    %252 = vmatprep.subr.bf16.mxu0 0
    %253 = vmatpush1.bf16.msra.mxu0 0
    %254 = vmatprep.subr.bf16.mxu0 0
    %255 = vmatpush1.bf16.msra.mxu0 0
    %256 = vmatprep.subr.bf16.mxu0 0
    %257 = vmatpush1.bf16.msra.mxu0 0
    %258 = vmatprep.subr.bf16.mxu0 0
    %259 = vmatpush1.bf16.msra.mxu0 0
    %260 = vmatprep.subr.bf16.mxu0 0
    %261 = vmatpush1.bf16.msra.mxu0 0
    %262 = vmatprep.subr.bf16.mxu0 0
    %263 = vmatpush1.bf16.msra.mxu0 0
    %264 = vmatprep.subr.bf16.mxu0 0
    %265 = vmatpush1.bf16.msra.mxu0 0
    %266 = vmatprep.subr.bf16.mxu0 0
    %267 = vmatpush1.bf16.msra.mxu0 0
    %268 = vmatprep.subr.bf16.mxu0 0
    %269 = vmatpush1.bf16.msra.mxu0 0
    %270 = vmatprep.subr.bf16.mxu0 0
    %271 = vmatpush1.bf16.msra.mxu0 0
    %272 = vmatprep.subr.bf16.mxu0 0
    %273 = vmatpush1.bf16.msra.mxu0 0
    %274 = vmatprep.mubr.bf16.mxu0 0
    %275 = vmatmul.mubr.bf16.gmra.mrb[0].mxu0 %v240
    %v276 = vpop.f32.mrb[0].mxu0
    %v277 = vadd.f32 0.0, %v276
    %v278 = vpop.f32.mrb[0].mxu0
    %v279 = vpop.f32.mrb[0].mxu0
    %v280 = vpop.f32.mrb[0].mxu0
    %281 = vdwg.mxu0
    %282 = vmatprep.subr.bf16.mxu0 0
    %283 = vmatpush1.bf16.msra.mxu0 %v35
    %284 = vmatprep.subr.bf16.mxu0 0
    %285 = vmatpush1.bf16.msra.mxu0 %v36
    %286 = vmatprep.subr.bf16.mxu0 0
    %287 = vmatpush1.bf16.msra.mxu0 %v37
    %288 = vmatprep.subr.bf16.mxu0 0
    %289 = vmatpush1.bf16.msra.mxu0 %v38
    %290 = vmatprep.subr.bf16.mxu0 0
    %291 = vmatpush1.bf16.msra.mxu0 0
    %292 = vmatprep.subr.bf16.mxu0 0
    %293 = vmatpush1.bf16.msra.mxu0 0
    %294 = vmatprep.subr.bf16.mxu0 0
    %295 = vmatpush1.bf16.msra.mxu0 0
    %296 = vmatprep.subr.bf16.mxu0 0
    %297 = vmatpush1.bf16.msra.mxu0 0
    %298 = vmatprep.subr.bf16.mxu0 0
    %299 = vmatpush1.bf16.msra.mxu0 0
    %300 = vmatprep.subr.bf16.mxu0 0
    %301 = vmatpush1.bf16.msra.mxu0 0
    %302 = vmatprep.subr.bf16.mxu0 0
    %303 = vmatpush1.bf16.msra.mxu0 0
    %304 = vmatprep.subr.bf16.mxu0 0
    %305 = vmatpush1.bf16.msra.mxu0 0
    %306 = vmatprep.subr.bf16.mxu0 0
    %307 = vmatpush1.bf16.msra.mxu0 0
    %308 = vmatprep.subr.bf16.mxu0 0
    %309 = vmatpush1.bf16.msra.mxu0 0
    %310 = vmatprep.subr.bf16.mxu0 0
    %311 = vmatpush1.bf16.msra.mxu0 0
    %312 = vmatprep.subr.bf16.mxu0 0
    %313 = vmatpush1.bf16.msra.mxu0 0
    %314 = vmatprep.mubr.bf16.mxu0 0
    %315 = vmatmul.mubr.bf16.gmra.mrb[0].mxu0 %v240
    %v316 = vpop.f32.mrb[0].mxu0
    %v317 = vadd.f32 %v127, %v316
    %v318 = vpop.f32.mrb[0].mxu0
    %v319 = vpop.f32.mrb[0].mxu0
    %v320 = vpop.f32.mrb[0].mxu0
    %321 = vdwg.mxu0
    %v322 = vxor.u32 %v317, 2147483648
    %v323 = vmul.f32 %v322, 1.442695
    %v324 = vpow.pop %v323
    %v325 = vadd.f32 %v324, 1.0
    %v326 = vrcp.pop %v325
    %v327 = vmul.f32 1.0, %v326
    %v328 = vtanh.pop %v317
    %v329 = vmul.f32 %v327, %v220
    %331 = vrot.lane.b32.xlu0 %v328, 64
    %v332 = vpop.permute.xlu0 %331
    %v334 = vmul.f32 %v327, %v332
    %336 = vrot.lane.b32.xlu0 %v334, 32
    %v337 = vpop.permute.xlu0 %336
    %v339 = vadd.f32 %v329, %v337
    %v340 = vtanh.pop %v339
    %342 = vrot.lane.b32.xlu0 %v340, 64
    %v343 = vpop.permute.xlu0 %342
    %v345 = vmul.f32 %v327, %v343
    %v346 = vmul.f32 %v345, %v157
    %v347 = vmul.f32 %v345, %v158
    %349 = vrot.lane.b32.xlu0 %v346, 32
    %v350 = vpop.permute.xlu0 %349
    %353 = vrot.lane.b32.xlu0 %v347, 64
    %v354 = vpop.permute.xlu0 %353
    %v356 = vsel %vm70, %v350, %v354
    %v357 = vpack.c.bf16 %v356, %v356
    %v359 = vsel %vm159, %v357, 0
    %361 = vmatprep.subr.bf16.mxu0 0
    %362 = vmatpush1.bf16.msra.mxu0 %v47
    %363 = vmatprep.subr.bf16.mxu0 0
    %364 = vmatpush1.bf16.msra.mxu0 %v48
    %365 = vmatprep.subr.bf16.mxu0 0
    %366 = vmatpush1.bf16.msra.mxu0 %v49
    %367 = vmatprep.subr.bf16.mxu0 0
    %368 = vmatpush1.bf16.msra.mxu0 %v50
    %369 = vmatprep.subr.bf16.mxu0 0
    %370 = vmatpush1.bf16.msra.mxu0 0
    %371 = vmatprep.subr.bf16.mxu0 0
    %372 = vmatpush1.bf16.msra.mxu0 0
    %373 = vmatprep.subr.bf16.mxu0 0
    %374 = vmatpush1.bf16.msra.mxu0 0
    %375 = vmatprep.subr.bf16.mxu0 0
    %376 = vmatpush1.bf16.msra.mxu0 0
    %377 = vmatprep.subr.bf16.mxu0 0
    %378 = vmatpush1.bf16.msra.mxu0 0
    %379 = vmatprep.subr.bf16.mxu0 0
    %380 = vmatpush1.bf16.msra.mxu0 0
    %381 = vmatprep.subr.bf16.mxu0 0
    %382 = vmatpush1.bf16.msra.mxu0 0
    %383 = vmatprep.subr.bf16.mxu0 0
    %384 = vmatpush1.bf16.msra.mxu0 0
    %385 = vmatprep.subr.bf16.mxu0 0
    %386 = vmatpush1.bf16.msra.mxu0 0
    %387 = vmatprep.subr.bf16.mxu0 0
    %388 = vmatpush1.bf16.msra.mxu0 0
    %389 = vmatprep.subr.bf16.mxu0 0
    %390 = vmatpush1.bf16.msra.mxu0 0
    %391 = vmatprep.subr.bf16.mxu0 0
    %392 = vmatpush1.bf16.msra.mxu0 0
    %393 = vmatprep.mubr.bf16.mxu0 0
    %394 = vmatmul.mubr.bf16.gmra.mrb[0].mxu0 %v359
    %v395 = vpop.f32.mrb[0].mxu0
    %v396 = vadd.f32 0.0, %v395
    %v397 = vpop.f32.mrb[0].mxu0
    %v398 = vpop.f32.mrb[0].mxu0
    %v399 = vpop.f32.mrb[0].mxu0
    %400 = vdwg.mxu0
    %401 = vmatprep.subr.bf16.mxu0 0
    %402 = vmatpush1.bf16.msra.mxu0 %v35
    %403 = vmatprep.subr.bf16.mxu0 0
    %404 = vmatpush1.bf16.msra.mxu0 %v36
    %405 = vmatprep.subr.bf16.mxu0 0
    %406 = vmatpush1.bf16.msra.mxu0 %v37
    %407 = vmatprep.subr.bf16.mxu0 0
    %408 = vmatpush1.bf16.msra.mxu0 %v38
    %409 = vmatprep.subr.bf16.mxu0 0
    %410 = vmatpush1.bf16.msra.mxu0 0
    %411 = vmatprep.subr.bf16.mxu0 0
    %412 = vmatpush1.bf16.msra.mxu0 0
    %413 = vmatprep.subr.bf16.mxu0 0
    %414 = vmatpush1.bf16.msra.mxu0 0
    %415 = vmatprep.subr.bf16.mxu0 0
    %416 = vmatpush1.bf16.msra.mxu0 0
    %417 = vmatprep.subr.bf16.mxu0 0
    %418 = vmatpush1.bf16.msra.mxu0 0
    %419 = vmatprep.subr.bf16.mxu0 0
    %420 = vmatpush1.bf16.msra.mxu0 0
    %421 = vmatprep.subr.bf16.mxu0 0
    %422 = vmatpush1.bf16.msra.mxu0 0
    %423 = vmatprep.subr.bf16.mxu0 0
    %424 = vmatpush1.bf16.msra.mxu0 0
    %425 = vmatprep.subr.bf16.mxu0 0
    %426 = vmatpush1.bf16.msra.mxu0 0
    %427 = vmatprep.subr.bf16.mxu0 0
    %428 = vmatpush1.bf16.msra.mxu0 0
    %429 = vmatprep.subr.bf16.mxu0 0
    %430 = vmatpush1.bf16.msra.mxu0 0
    %431 = vmatprep.subr.bf16.mxu0 0
    %432 = vmatpush1.bf16.msra.mxu0 0
    %433 = vmatprep.mubr.bf16.mxu0 0
    %434 = vmatmul.mubr.bf16.gmra.mrb[0].mxu0 %v359
    %v435 = vpop.f32.mrb[0].mxu0
    %v436 = vadd.f32 %v130, %v435
    %v437 = vpop.f32.mrb[0].mxu0
    %v438 = vpop.f32.mrb[0].mxu0
    %v439 = vpop.f32.mrb[0].mxu0
    %440 = vdwg.mxu0
    %v441 = vxor.u32 %v436, 2147483648
    %v442 = vmul.f32 %v441, 1.442695
    %v443 = vpow.pop %v442
    %v444 = vadd.f32 %v443, 1.0
    %v445 = vrcp.pop %v444
    %v446 = vmul.f32 1.0, %v445
    %v447 = vtanh.pop %v436
    %v448 = vmul.f32 %v446, %v339
    %450 = vrot.lane.b32.xlu0 %v447, 64
    %v451 = vpop.permute.xlu0 %450
    %v453 = vmul.f32 %v446, %v451
    %455 = vrot.lane.b32.xlu0 %v453, 32
    %v456 = vpop.permute.xlu0 %455
    %v458 = vadd.f32 %v448, %v456
    %v459 = vtanh.pop %v458
    %461 = vrot.lane.b32.xlu0 %v459, 64
    %v462 = vpop.permute.xlu0 %461
    %v464 = vmul.f32 %v446, %v462
    %v465 = vmul.f32 %v464, %v157
    %v466 = vmul.f32 %v464, %v158
    %468 = vrot.lane.b32.xlu0 %v465, 32
    %v469 = vpop.permute.xlu0 %468
    %472 = vrot.lane.b32.xlu0 %v466, 64
    %v473 = vpop.permute.xlu0 %472
    %v475 = vsel %vm70, %v469, %v473
    %v476 = vpack.c.bf16 %v475, %v475
    %v478 = vsel %vm159, %v476, 0
    %480 = vmatprep.subr.bf16.mxu0 0
    %481 = vmatpush1.bf16.msra.mxu0 %v47
    %482 = vmatprep.subr.bf16.mxu0 0
    %483 = vmatpush1.bf16.msra.mxu0 %v48
    %484 = vmatprep.subr.bf16.mxu0 0
    %485 = vmatpush1.bf16.msra.mxu0 %v49
    %486 = vmatprep.subr.bf16.mxu0 0
    %487 = vmatpush1.bf16.msra.mxu0 %v50
    %488 = vmatprep.subr.bf16.mxu0 0
    %489 = vmatpush1.bf16.msra.mxu0 0
    %490 = vmatprep.subr.bf16.mxu0 0
    %491 = vmatpush1.bf16.msra.mxu0 0
    %492 = vmatprep.subr.bf16.mxu0 0
    %493 = vmatpush1.bf16.msra.mxu0 0
    %494 = vmatprep.subr.bf16.mxu0 0
    %495 = vmatpush1.bf16.msra.mxu0 0
    %496 = vmatprep.subr.bf16.mxu0 0
    %497 = vmatpush1.bf16.msra.mxu0 0
    %498 = vmatprep.subr.bf16.mxu0 0
    %499 = vmatpush1.bf16.msra.mxu0 0
    %500 = vmatprep.subr.bf16.mxu0 0
    %501 = vmatpush1.bf16.msra.mxu0 0
    %502 = vmatprep.subr.bf16.mxu0 0
    %503 = vmatpush1.bf16.msra.mxu0 0
    %504 = vmatprep.subr.bf16.mxu0 0
    %505 = vmatpush1.bf16.msra.mxu0 0
    %506 = vmatprep.subr.bf16.mxu0 0
    %507 = vmatpush1.bf16.msra.mxu0 0
    %508 = vmatprep.subr.bf16.mxu0 0
    %509 = vmatpush1.bf16.msra.mxu0 0
    %510 = vmatprep.subr.bf16.mxu0 0
    %511 = vmatpush1.bf16.msra.mxu0 0
    %512 = vmatprep.mubr.bf16.mxu0 0
    %513 = vmatmul.mubr.bf16.gmra.mrb[0].mxu0 %v478
    %v514 = vpop.f32.mrb[0].mxu0
    %v515 = vadd.f32 0.0, %v514
    %v516 = vpop.f32.mrb[0].mxu0
    %v517 = vpop.f32.mrb[0].mxu0
    %v518 = vpop.f32.mrb[0].mxu0
    %519 = vdwg.mxu0
    %520 = vmatprep.subr.bf16.mxu0 0
    %521 = vmatpush1.bf16.msra.mxu0 %v35
    %522 = vmatprep.subr.bf16.mxu0 0
    %523 = vmatpush1.bf16.msra.mxu0 %v36
    %524 = vmatprep.subr.bf16.mxu0 0
    %525 = vmatpush1.bf16.msra.mxu0 %v37
    %526 = vmatprep.subr.bf16.mxu0 0
    %527 = vmatpush1.bf16.msra.mxu0 %v38
    %528 = vmatprep.subr.bf16.mxu0 0
    %529 = vmatpush1.bf16.msra.mxu0 0
    %530 = vmatprep.subr.bf16.mxu0 0
    %531 = vmatpush1.bf16.msra.mxu0 0
    %532 = vmatprep.subr.bf16.mxu0 0
    %533 = vmatpush1.bf16.msra.mxu0 0
    %534 = vmatprep.subr.bf16.mxu0 0
    %535 = vmatpush1.bf16.msra.mxu0 0
    %536 = vmatprep.subr.bf16.mxu0 0
    %537 = vmatpush1.bf16.msra.mxu0 0
    %538 = vmatprep.subr.bf16.mxu0 0
    %539 = vmatpush1.bf16.msra.mxu0 0
    %540 = vmatprep.subr.bf16.mxu0 0
    %541 = vmatpush1.bf16.msra.mxu0 0
    %542 = vmatprep.subr.bf16.mxu0 0
    %543 = vmatpush1.bf16.msra.mxu0 0
    %544 = vmatprep.subr.bf16.mxu0 0
    %545 = vmatpush1.bf16.msra.mxu0 0
    %546 = vmatprep.subr.bf16.mxu0 0
    %547 = vmatpush1.bf16.msra.mxu0 0
    %548 = vmatprep.subr.bf16.mxu0 0
    %549 = vmatpush1.bf16.msra.mxu0 0
    %550 = vmatprep.subr.bf16.mxu0 0
    %551 = vmatpush1.bf16.msra.mxu0 0
    %552 = vmatprep.mubr.bf16.mxu0 0
    %553 = vmatmul.mubr.bf16.gmra.mrb[0].mxu0 %v478
    %v554 = vpop.f32.mrb[0].mxu0
    %v555 = vadd.f32 %v135, %v554
    %v556 = vpop.f32.mrb[0].mxu0
    %v557 = vpop.f32.mrb[0].mxu0
    %v558 = vpop.f32.mrb[0].mxu0
    %559 = vdwg.mxu0
    %v560 = vxor.u32 %v555, 2147483648
    %v561 = vmul.f32 %v560, 1.442695
    %v562 = vpow.pop %v561
    %v563 = vadd.f32 %v562, 1.0
    %v564 = vrcp.pop %v563
    %v565 = vmul.f32 1.0, %v564
    %v566 = vtanh.pop %v555
    %v567 = vmul.f32 %v565, %v458
    %569 = vrot.lane.b32.xlu0 %v566, 64
    %v570 = vpop.permute.xlu0 %569
    %v572 = vmul.f32 %v565, %v570
    %574 = vrot.lane.b32.xlu0 %v572, 32
    %v575 = vpop.permute.xlu0 %574
    %v577 = vadd.f32 %v567, %v575
    %v578 = vtanh.pop %v577
    %580 = vrot.lane.b32.xlu0 %v578, 64
    %v581 = vpop.permute.xlu0 %580
    %v583 = vmul.f32 %v565, %v581
    %v584 = vmul.f32 %v583, %v157
    %v585 = vmul.f32 %v583, %v158
    %587 = vrot.lane.b32.xlu0 %v584, 32
    %v588 = vpop.permute.xlu0 %587
    %591 = vrot.lane.b32.xlu0 %v585, 64
    %v592 = vpop.permute.xlu0 %591
    %v594 = vsel %vm70, %v588, %v592
    %v595 = vpack.c.bf16 %v594, %v594
    %v597 = vsel %vm159, %v595, 0
    %599 = vmatprep.subr.bf16.mxu0 0
    %600 = vmatpush1.bf16.msra.mxu0 %v47
    %601 = vmatprep.subr.bf16.mxu0 0
    %602 = vmatpush1.bf16.msra.mxu0 %v48
    %603 = vmatprep.subr.bf16.mxu0 0
    %604 = vmatpush1.bf16.msra.mxu0 %v49
    %605 = vmatprep.subr.bf16.mxu0 0
    %606 = vmatpush1.bf16.msra.mxu0 %v50
    %607 = vmatprep.subr.bf16.mxu0 0
    %608 = vmatpush1.bf16.msra.mxu0 0
    %609 = vmatprep.subr.bf16.mxu0 0
    %610 = vmatpush1.bf16.msra.mxu0 0
    %611 = vmatprep.subr.bf16.mxu0 0
    %612 = vmatpush1.bf16.msra.mxu0 0
    %613 = vmatprep.subr.bf16.mxu0 0
    %614 = vmatpush1.bf16.msra.mxu0 0
    %615 = vmatprep.subr.bf16.mxu0 0
    %616 = vmatpush1.bf16.msra.mxu0 0
    %617 = vmatprep.subr.bf16.mxu0 0
    %618 = vmatpush1.bf16.msra.mxu0 0
    %619 = vmatprep.subr.bf16.mxu0 0
    %620 = vmatpush1.bf16.msra.mxu0 0
    %621 = vmatprep.subr.bf16.mxu0 0
    %622 = vmatpush1.bf16.msra.mxu0 0
    %623 = vmatprep.subr.bf16.mxu0 0
    %624 = vmatpush1.bf16.msra.mxu0 0
    %625 = vmatprep.subr.bf16.mxu0 0
    %626 = vmatpush1.bf16.msra.mxu0 0
    %627 = vmatprep.subr.bf16.mxu0 0
    %628 = vmatpush1.bf16.msra.mxu0 0
    %629 = vmatprep.subr.bf16.mxu0 0
    %630 = vmatpush1.bf16.msra.mxu0 0
    %631 = vmatprep.mubr.bf16.mxu0 0
    %632 = vmatmul.mubr.bf16.gmra.mrb[0].mxu0 %v597
    %v633 = vpop.f32.mrb[0].mxu0
    %v634 = vadd.f32 0.0, %v633
    %v635 = vpop.f32.mrb[0].mxu0
    %v636 = vpop.f32.mrb[0].mxu0
    %v637 = vpop.f32.mrb[0].mxu0
    %638 = vdwg.mxu0
    %639 = vmatprep.subr.bf16.mxu0 0
    %640 = vmatpush1.bf16.msra.mxu0 %v35
    %641 = vmatprep.subr.bf16.mxu0 0
    %642 = vmatpush1.bf16.msra.mxu0 %v36
    %643 = vmatprep.subr.bf16.mxu0 0
    %644 = vmatpush1.bf16.msra.mxu0 %v37
    %645 = vmatprep.subr.bf16.mxu0 0
    %646 = vmatpush1.bf16.msra.mxu0 %v38
    %647 = vmatprep.subr.bf16.mxu0 0
    %648 = vmatpush1.bf16.msra.mxu0 0
    %649 = vmatprep.subr.bf16.mxu0 0
    %650 = vmatpush1.bf16.msra.mxu0 0
    %651 = vmatprep.subr.bf16.mxu0 0
    %652 = vmatpush1.bf16.msra.mxu0 0
    %653 = vmatprep.subr.bf16.mxu0 0
    %654 = vmatpush1.bf16.msra.mxu0 0
    %655 = vmatprep.subr.bf16.mxu0 0
    %656 = vmatpush1.bf16.msra.mxu0 0
    %657 = vmatprep.subr.bf16.mxu0 0
    %658 = vmatpush1.bf16.msra.mxu0 0
    %659 = vmatprep.subr.bf16.mxu0 0
    %660 = vmatpush1.bf16.msra.mxu0 0
    %661 = vmatprep.subr.bf16.mxu0 0
    %662 = vmatpush1.bf16.msra.mxu0 0
    %663 = vmatprep.subr.bf16.mxu0 0
    %664 = vmatpush1.bf16.msra.mxu0 0
    %665 = vmatprep.subr.bf16.mxu0 0
    %666 = vmatpush1.bf16.msra.mxu0 0
    %667 = vmatprep.subr.bf16.mxu0 0
    %668 = vmatpush1.bf16.msra.mxu0 0
    %669 = vmatprep.subr.bf16.mxu0 0
    %670 = vmatpush1.bf16.msra.mxu0 0
    %671 = vmatprep.mubr.bf16.mxu0 0
    %672 = vmatmul.mubr.bf16.gmra.mrb[0].mxu0 %v597
    %v673 = vpop.f32.mrb[0].mxu0
    %v674 = vadd.f32 %v139, %v673
    %v675 = vpop.f32.mrb[0].mxu0
    %v676 = vpop.f32.mrb[0].mxu0
    %v677 = vpop.f32.mrb[0].mxu0
    %678 = vdwg.mxu0
    %v679 = vxor.u32 %v674, 2147483648
    %v680 = vmul.f32 %v679, 1.442695
    %v681 = vpow.pop %v680
    %v682 = vadd.f32 %v681, 1.0
    %v683 = vrcp.pop %v682
    %v684 = vmul.f32 1.0, %v683
    %v685 = vtanh.pop %v674
    %v686 = vmul.f32 %v684, %v577
    %688 = vrot.lane.b32.xlu0 %v685, 64
    %v689 = vpop.permute.xlu0 %688
    %v691 = vmul.f32 %v684, %v689
    %693 = vrot.lane.b32.xlu0 %v691, 32
    %v694 = vpop.permute.xlu0 %693
    %v696 = vadd.f32 %v686, %v694
    %v697 = vtanh.pop %v696
    %699 = vrot.lane.b32.xlu0 %v697, 64
    %v700 = vpop.permute.xlu0 %699
    %v702 = vmul.f32 %v684, %v700
    %v703 = vmul.f32 %v702, %v157
    %v704 = vmul.f32 %v702, %v158
    %706 = vrot.lane.b32.xlu0 %v703, 32
    %v707 = vpop.permute.xlu0 %706
    %710 = vrot.lane.b32.xlu0 %v704, 64
    %v711 = vpop.permute.xlu0 %710
    %v713 = vsel %vm70, %v707, %v711
    %v714 = vpack.c.bf16 %v713, %v713
    %v716 = vsel %vm159, %v714, 0
    %718 = vmatprep.subr.bf16.mxu0 0
    %719 = vmatpush1.bf16.msra.mxu0 %v47
    %720 = vmatprep.subr.bf16.mxu0 0
    %721 = vmatpush1.bf16.msra.mxu0 %v48
    %722 = vmatprep.subr.bf16.mxu0 0
    %723 = vmatpush1.bf16.msra.mxu0 %v49
    %724 = vmatprep.subr.bf16.mxu0 0
    %725 = vmatpush1.bf16.msra.mxu0 %v50
    %726 = vmatprep.subr.bf16.mxu0 0
    %727 = vmatpush1.bf16.msra.mxu0 0
    %728 = vmatprep.subr.bf16.mxu0 0
    %729 = vmatpush1.bf16.msra.mxu0 0
    %730 = vmatprep.subr.bf16.mxu0 0
    %731 = vmatpush1.bf16.msra.mxu0 0
    %732 = vmatprep.subr.bf16.mxu0 0
    %733 = vmatpush1.bf16.msra.mxu0 0
    %734 = vmatprep.subr.bf16.mxu0 0
    %735 = vmatpush1.bf16.msra.mxu0 0
    %736 = vmatprep.subr.bf16.mxu0 0
    %737 = vmatpush1.bf16.msra.mxu0 0
    %738 = vmatprep.subr.bf16.mxu0 0
    %739 = vmatpush1.bf16.msra.mxu0 0
    %740 = vmatprep.subr.bf16.mxu0 0
    %741 = vmatpush1.bf16.msra.mxu0 0
    %742 = vmatprep.subr.bf16.mxu0 0
    %743 = vmatpush1.bf16.msra.mxu0 0
    %744 = vmatprep.subr.bf16.mxu0 0
    %745 = vmatpush1.bf16.msra.mxu0 0
    %746 = vmatprep.subr.bf16.mxu0 0
    %747 = vmatpush1.bf16.msra.mxu0 0
    %748 = vmatprep.subr.bf16.mxu0 0
    %749 = vmatpush1.bf16.msra.mxu0 0
    %750 = vmatprep.mubr.bf16.mxu0 0
    %751 = vmatmul.mubr.bf16.gmra.mrb[0].mxu0 %v716
    %v752 = vpop.f32.mrb[0].mxu0
    %v753 = vadd.f32 0.0, %v752
    %v754 = vpop.f32.mrb[0].mxu0
    %v755 = vpop.f32.mrb[0].mxu0
    %v756 = vpop.f32.mrb[0].mxu0
    %757 = vdwg.mxu0
    %758 = vmatprep.subr.bf16.mxu0 0
    %759 = vmatpush1.bf16.msra.mxu0 %v35
    %760 = vmatprep.subr.bf16.mxu0 0
    %761 = vmatpush1.bf16.msra.mxu0 %v36
    %762 = vmatprep.subr.bf16.mxu0 0
    %763 = vmatpush1.bf16.msra.mxu0 %v37
    %764 = vmatprep.subr.bf16.mxu0 0
    %765 = vmatpush1.bf16.msra.mxu0 %v38
    %766 = vmatprep.subr.bf16.mxu0 0
    %767 = vmatpush1.bf16.msra.mxu0 0
    %768 = vmatprep.subr.bf16.mxu0 0
    %769 = vmatpush1.bf16.msra.mxu0 0
    %770 = vmatprep.subr.bf16.mxu0 0
    %771 = vmatpush1.bf16.msra.mxu0 0
    %772 = vmatprep.subr.bf16.mxu0 0
    %773 = vmatpush1.bf16.msra.mxu0 0
    %774 = vmatprep.subr.bf16.mxu0 0
    %775 = vmatpush1.bf16.msra.mxu0 0
    %776 = vmatprep.subr.bf16.mxu0 0
    %777 = vmatpush1.bf16.msra.mxu0 0
    %778 = vmatprep.subr.bf16.mxu0 0
    %779 = vmatpush1.bf16.msra.mxu0 0
    %780 = vmatprep.subr.bf16.mxu0 0
    %781 = vmatpush1.bf16.msra.mxu0 0
    %782 = vmatprep.subr.bf16.mxu0 0
    %783 = vmatpush1.bf16.msra.mxu0 0
    %784 = vmatprep.subr.bf16.mxu0 0
    %785 = vmatpush1.bf16.msra.mxu0 0
    %786 = vmatprep.subr.bf16.mxu0 0
    %787 = vmatpush1.bf16.msra.mxu0 0
    %788 = vmatprep.subr.bf16.mxu0 0
    %789 = vmatpush1.bf16.msra.mxu0 0
    %790 = vmatprep.mubr.bf16.mxu0 0
    %791 = vmatmul.mubr.bf16.gmra.mrb[0].mxu0 %v716
    %v792 = vpop.f32.mrb[0].mxu0
    %v793 = vadd.f32 %v145, %v792
    %v794 = vpop.f32.mrb[0].mxu0
    %v795 = vpop.f32.mrb[0].mxu0
    %v796 = vpop.f32.mrb[0].mxu0
    %797 = vdwg.mxu0
    %v798 = vxor.u32 %v793, 2147483648
    %v799 = vmul.f32 %v798, 1.442695
    %v800 = vpow.pop %v799
    %v801 = vadd.f32 %v800, 1.0
    %v802 = vrcp.pop %v801
    %v803 = vmul.f32 1.0, %v802
    %v804 = vtanh.pop %v793
    %v805 = vmul.f32 %v803, %v696
    %807 = vrot.lane.b32.xlu0 %v804, 64
    %v808 = vpop.permute.xlu0 %807
    %v810 = vmul.f32 %v803, %v808
    %812 = vrot.lane.b32.xlu0 %v810, 32
    %v813 = vpop.permute.xlu0 %812
    %v815 = vadd.f32 %v805, %v813
    %v816 = vtanh.pop %v815
    %818 = vrot.lane.b32.xlu0 %v816, 64
    %v819 = vpop.permute.xlu0 %818
    %v821 = vmul.f32 %v803, %v819
    %v822 = vmul.f32 %v821, %v157
    %v823 = vmul.f32 %v821, %v158
    %825 = vrot.lane.b32.xlu0 %v822, 32
    %v826 = vpop.permute.xlu0 %825
    %829 = vrot.lane.b32.xlu0 %v823, 64
    %v830 = vpop.permute.xlu0 %829
    %v832 = vsel %vm70, %v826, %v830
    %v833 = vpack.c.bf16 %v832, %v832
    %v835 = vsel %vm159, %v833, 0
    %837 = vmatprep.subr.bf16.mxu0 0
    %838 = vmatpush1.bf16.msra.mxu0 %v47
    %839 = vmatprep.subr.bf16.mxu0 0
    %840 = vmatpush1.bf16.msra.mxu0 %v48
    %841 = vmatprep.subr.bf16.mxu0 0
    %842 = vmatpush1.bf16.msra.mxu0 %v49
    %843 = vmatprep.subr.bf16.mxu0 0
    %844 = vmatpush1.bf16.msra.mxu0 %v50
    %845 = vmatprep.subr.bf16.mxu0 0
    %846 = vmatpush1.bf16.msra.mxu0 0
    %847 = vmatprep.subr.bf16.mxu0 0
    %848 = vmatpush1.bf16.msra.mxu0 0
    %849 = vmatprep.subr.bf16.mxu0 0
    %850 = vmatpush1.bf16.msra.mxu0 0
    %851 = vmatprep.subr.bf16.mxu0 0
    %852 = vmatpush1.bf16.msra.mxu0 0
    %853 = vmatprep.subr.bf16.mxu0 0
    %854 = vmatpush1.bf16.msra.mxu0 0
    %855 = vmatprep.subr.bf16.mxu0 0
    %856 = vmatpush1.bf16.msra.mxu0 0
    %857 = vmatprep.subr.bf16.mxu0 0
    %858 = vmatpush1.bf16.msra.mxu0 0
    %859 = vmatprep.subr.bf16.mxu0 0
    %860 = vmatpush1.bf16.msra.mxu0 0
    %861 = vmatprep.subr.bf16.mxu0 0
    %862 = vmatpush1.bf16.msra.mxu0 0
    %863 = vmatprep.subr.bf16.mxu0 0
    %864 = vmatpush1.bf16.msra.mxu0 0
    %865 = vmatprep.subr.bf16.mxu0 0
    %866 = vmatpush1.bf16.msra.mxu0 0
    %867 = vmatprep.subr.bf16.mxu0 0
    %868 = vmatpush1.bf16.msra.mxu0 0
    %869 = vmatprep.mubr.bf16.mxu0 0
    %870 = vmatmul.mubr.bf16.gmra.mrb[0].mxu0 %v835
    %v871 = vpop.f32.mrb[0].mxu0
    %v872 = vadd.f32 0.0, %v871
    %v873 = vpop.f32.mrb[0].mxu0
    %v874 = vpop.f32.mrb[0].mxu0
    %v875 = vpop.f32.mrb[0].mxu0
    %876 = vdwg.mxu0
    %877 = vmatprep.subr.bf16.mxu0 0
    %878 = vmatpush1.bf16.msra.mxu0 %v35
    %879 = vmatprep.subr.bf16.mxu0 0
    %880 = vmatpush1.bf16.msra.mxu0 %v36
    %881 = vmatprep.subr.bf16.mxu0 0
    %882 = vmatpush1.bf16.msra.mxu0 %v37
    %883 = vmatprep.subr.bf16.mxu0 0
    %884 = vmatpush1.bf16.msra.mxu0 %v38
    %885 = vmatprep.subr.bf16.mxu0 0
    %886 = vmatpush1.bf16.msra.mxu0 0
    %887 = vmatprep.subr.bf16.mxu0 0
    %888 = vmatpush1.bf16.msra.mxu0 0
    %889 = vmatprep.subr.bf16.mxu0 0
    %890 = vmatpush1.bf16.msra.mxu0 0
    %891 = vmatprep.subr.bf16.mxu0 0
    %892 = vmatpush1.bf16.msra.mxu0 0
    %893 = vmatprep.subr.bf16.mxu0 0
    %894 = vmatpush1.bf16.msra.mxu0 0
    %895 = vmatprep.subr.bf16.mxu0 0
    %896 = vmatpush1.bf16.msra.mxu0 0
    %897 = vmatprep.subr.bf16.mxu0 0
    %898 = vmatpush1.bf16.msra.mxu0 0
    %899 = vmatprep.subr.bf16.mxu0 0
    %900 = vmatpush1.bf16.msra.mxu0 0
    %901 = vmatprep.subr.bf16.mxu0 0
    %902 = vmatpush1.bf16.msra.mxu0 0
    %903 = vmatprep.subr.bf16.mxu0 0
    %904 = vmatpush1.bf16.msra.mxu0 0
    %905 = vmatprep.subr.bf16.mxu0 0
    %906 = vmatpush1.bf16.msra.mxu0 0
    %907 = vmatprep.subr.bf16.mxu0 0
    %908 = vmatpush1.bf16.msra.mxu0 0
    %909 = vmatprep.mubr.bf16.mxu0 0
    %910 = vmatmul.mubr.bf16.gmra.mrb[0].mxu0 %v835
    %v911 = vpop.f32.mrb[0].mxu0
    %v912 = vadd.f32 %v148, %v911
    %v913 = vpop.f32.mrb[0].mxu0
    %v914 = vpop.f32.mrb[0].mxu0
    %v915 = vpop.f32.mrb[0].mxu0
    %916 = vdwg.mxu0
    %v917 = vxor.u32 %v912, 2147483648
    %v918 = vmul.f32 %v917, 1.442695
    %v919 = vpow.pop %v918
    %v920 = vadd.f32 %v919, 1.0
    %v921 = vrcp.pop %v920
    %v922 = vmul.f32 1.0, %v921
    %v923 = vtanh.pop %v912
    %v924 = vmul.f32 %v922, %v815
    %926 = vrot.lane.b32.xlu0 %v923, 64
    %v927 = vpop.permute.xlu0 %926
    %v929 = vmul.f32 %v922, %v927
    %931 = vrot.lane.b32.xlu0 %v929, 32
    %v932 = vpop.permute.xlu0 %931
    %v934 = vadd.f32 %v924, %v932
    %v935 = vtanh.pop %v934
    %937 = vrot.lane.b32.xlu0 %v935, 64
    %v938 = vpop.permute.xlu0 %937
    %v940 = vmul.f32 %v922, %v938
    %v941 = vmul.f32 %v940, %v157
    %v942 = vmul.f32 %v940, %v158
    %944 = vrot.lane.b32.xlu0 %v941, 32
    %v945 = vpop.permute.xlu0 %944
    %948 = vrot.lane.b32.xlu0 %v942, 64
    %v949 = vpop.permute.xlu0 %948
    %v951 = vsel %vm70, %v945, %v949
    %v952 = vpack.c.bf16 %v951, %v951
    %v954 = vsel %vm159, %v952, 0
    %956 = vmatprep.subr.bf16.mxu0 0
    %957 = vmatpush1.bf16.msra.mxu0 %v47
    %958 = vmatprep.subr.bf16.mxu0 0
    %959 = vmatpush1.bf16.msra.mxu0 %v48
    %960 = vmatprep.subr.bf16.mxu0 0
    %961 = vmatpush1.bf16.msra.mxu0 %v49
    %962 = vmatprep.subr.bf16.mxu0 0
    %963 = vmatpush1.bf16.msra.mxu0 %v50
    %964 = vmatprep.subr.bf16.mxu0 0
    %965 = vmatpush1.bf16.msra.mxu0 0
    %966 = vmatprep.subr.bf16.mxu0 0
    %967 = vmatpush1.bf16.msra.mxu0 0
    %968 = vmatprep.subr.bf16.mxu0 0
    %969 = vmatpush1.bf16.msra.mxu0 0
    %970 = vmatprep.subr.bf16.mxu0 0
    %971 = vmatpush1.bf16.msra.mxu0 0
    %972 = vmatprep.subr.bf16.mxu0 0
    %973 = vmatpush1.bf16.msra.mxu0 0
    %974 = vmatprep.subr.bf16.mxu0 0
    %975 = vmatpush1.bf16.msra.mxu0 0
    %976 = vmatprep.subr.bf16.mxu0 0
    %977 = vmatpush1.bf16.msra.mxu0 0
    %978 = vmatprep.subr.bf16.mxu0 0
    %979 = vmatpush1.bf16.msra.mxu0 0
    %980 = vmatprep.subr.bf16.mxu0 0
    %981 = vmatpush1.bf16.msra.mxu0 0
    %982 = vmatprep.subr.bf16.mxu0 0
    %983 = vmatpush1.bf16.msra.mxu0 0
    %984 = vmatprep.subr.bf16.mxu0 0
    %985 = vmatpush1.bf16.msra.mxu0 0
    %986 = vmatprep.subr.bf16.mxu0 0
    %987 = vmatpush1.bf16.msra.mxu0 0
    %988 = vmatprep.mubr.bf16.mxu0 0
    %989 = vmatmul.mubr.bf16.gmra.mrb[0].mxu0 %v954
    %v990 = vpop.f32.mrb[0].mxu0
    %v991 = vadd.f32 0.0, %v990
    %v992 = vpop.f32.mrb[0].mxu0
    %v993 = vpop.f32.mrb[0].mxu0
    %v994 = vpop.f32.mrb[0].mxu0
    %995 = vdwg.mxu0
    %996 = vmatprep.subr.bf16.mxu0 0
    %997 = vmatpush1.bf16.msra.mxu0 %v35
    %998 = vmatprep.subr.bf16.mxu0 0
    %999 = vmatpush1.bf16.msra.mxu0 %v36
    %1000 = vmatprep.subr.bf16.mxu0 0
    %1001 = vmatpush1.bf16.msra.mxu0 %v37
    %1002 = vmatprep.subr.bf16.mxu0 0
    %1003 = vmatpush1.bf16.msra.mxu0 %v38
    %1004 = vmatprep.subr.bf16.mxu0 0
    %1005 = vmatpush1.bf16.msra.mxu0 0
    %1006 = vmatprep.subr.bf16.mxu0 0
    %1007 = vmatpush1.bf16.msra.mxu0 0
    %1008 = vmatprep.subr.bf16.mxu0 0
    %1009 = vmatpush1.bf16.msra.mxu0 0
    %1010 = vmatprep.subr.bf16.mxu0 0
    %1011 = vmatpush1.bf16.msra.mxu0 0
    %1012 = vmatprep.subr.bf16.mxu0 0
    %1013 = vmatpush1.bf16.msra.mxu0 0
    %1014 = vmatprep.subr.bf16.mxu0 0
    %1015 = vmatpush1.bf16.msra.mxu0 0
    %1016 = vmatprep.subr.bf16.mxu0 0
    %1017 = vmatpush1.bf16.msra.mxu0 0
    %1018 = vmatprep.subr.bf16.mxu0 0
    %1019 = vmatpush1.bf16.msra.mxu0 0
    %1020 = vmatprep.subr.bf16.mxu0 0
    %1021 = vmatpush1.bf16.msra.mxu0 0
    %1022 = vmatprep.subr.bf16.mxu0 0
    %1023 = vmatpush1.bf16.msra.mxu0 0
    %1024 = vmatprep.subr.bf16.mxu0 0
    %1025 = vmatpush1.bf16.msra.mxu0 0
    %1026 = vmatprep.subr.bf16.mxu0 0
    %1027 = vmatpush1.bf16.msra.mxu0 0
    %1028 = vmatprep.mubr.bf16.mxu0 0
    %1029 = vmatmul.mubr.bf16.gmra.mrb[0].mxu0 %v954
    %v1030 = vpop.f32.mrb[0].mxu0
    %v1031 = vadd.f32 %v153, %v1030
    %v1032 = vpop.f32.mrb[0].mxu0
    %v1033 = vpop.f32.mrb[0].mxu0
    %v1034 = vpop.f32.mrb[0].mxu0
    %1035 = vdwg.mxu0
    %v1036 = vxor.u32 %v1031, 2147483648
    %v1037 = vmul.f32 %v1036, 1.442695
    %v1038 = vpow.pop %v1037
    %v1039 = vadd.f32 %v1038, 1.0
    %v1040 = vrcp.pop %v1039
    %v1041 = vmul.f32 1.0, %v1040
    %v1042 = vtanh.pop %v1031
    %v1043 = vmul.f32 %v1041, %v934
    %1045 = vrot.lane.b32.xlu0 %v1042, 64
    %v1046 = vpop.permute.xlu0 %1045
    %v1048 = vmul.f32 %v1041, %v1046
    %1050 = vrot.lane.b32.xlu0 %v1048, 32
    %v1051 = vpop.permute.xlu0 %1050
    %v1053 = vadd.f32 %v1043, %v1051
    %v1054 = vtanh.pop %v1053
    %1056 = vrot.lane.b32.xlu0 %v1054, 64
    %v1057 = vpop.permute.xlu0 %1056
    %v1059 = vmul.f32 %v1041, %v1057
    %v1060 = vmul.f32 %v1059, %v157
    %v1061 = vmul.f32 %v1059, %v158
    %1063 = vrot.lane.b32.xlu0 %v1060, 32
    %v1064 = vpop.permute.xlu0 %1063
    %1067 = vrot.lane.b32.xlu0 %v1061, 64
    %v1068 = vpop.permute.xlu0 %1067
    %v1070 = vsel %vm70, %v1064, %v1068
    %v1071 = vpack.c.bf16 %v1070, %v1070
    %v1073 = vsel %vm159, %v1071, 0
    %1075 = vmatprep.subr.bf16.mxu0 0
    %1076 = vmatpush1.bf16.msra.mxu0 %v47
    %1077 = vmatprep.subr.bf16.mxu0 0
    %1078 = vmatpush1.bf16.msra.mxu0 %v48
    %1079 = vmatprep.subr.bf16.mxu0 0
    %1080 = vmatpush1.bf16.msra.mxu0 %v49
    %1081 = vmatprep.subr.bf16.mxu0 0
    %1082 = vmatpush1.bf16.msra.mxu0 %v50
    %1083 = vmatprep.subr.bf16.mxu0 0
    %1084 = vmatpush1.bf16.msra.mxu0 0
    %1085 = vmatprep.subr.bf16.mxu0 0
    %1086 = vmatpush1.bf16.msra.mxu0 0
    %1087 = vmatprep.subr.bf16.mxu0 0
    %1088 = vmatpush1.bf16.msra.mxu0 0
    %1089 = vmatprep.subr.bf16.mxu0 0
    %1090 = vmatpush1.bf16.msra.mxu0 0
    %1091 = vmatprep.subr.bf16.mxu0 0
    %1092 = vmatpush1.bf16.msra.mxu0 0
    %1093 = vmatprep.subr.bf16.mxu0 0
    %1094 = vmatpush1.bf16.msra.mxu0 0
    %1095 = vmatprep.subr.bf16.mxu0 0
    %1096 = vmatpush1.bf16.msra.mxu0 0
    %1097 = vmatprep.subr.bf16.mxu0 0
    %1098 = vmatpush1.bf16.msra.mxu0 0
    %1099 = vmatprep.subr.bf16.mxu0 0
    %1100 = vmatpush1.bf16.msra.mxu0 0
    %1101 = vmatprep.subr.bf16.mxu0 0
    %1102 = vmatpush1.bf16.msra.mxu0 0
    %1103 = vmatprep.subr.bf16.mxu0 0
    %1104 = vmatpush1.bf16.msra.mxu0 0
    %1105 = vmatprep.subr.bf16.mxu0 0
    %1106 = vmatpush1.bf16.msra.mxu0 0
    %1107 = vmatprep.mubr.bf16.mxu0 0
    %1108 = vmatmul.mubr.bf16.gmra.mrb[0].mxu0 %v1073
    %v1109 = vpop.f32.mrb[0].mxu0
    %v1110 = vadd.f32 0.0, %v1109
    %v1111 = vpop.f32.mrb[0].mxu0
    %v1112 = vpop.f32.mrb[0].mxu0
    %v1113 = vpop.f32.mrb[0].mxu0
    %1114 = vdwg.mxu0
    %v1116 = vrot.slane %v1110, 2
    %v1118 = vadd.f32 %v277, %v1116
    %v1119 = vlaneseq
    %v1120 = vshrl.u32 %v1119, 7
    %v1121 = vsub.s32 0, %v1120
    %v1122 = vrot.slane %v51, %v1121
    %v1123 = vadd.f32 %v1118, %v1122
    %v1124 = vlaneseq
    %v1125 = vshrl.u32 %v1124, 7
    %v1126 = vsub.s32 1, %v1125
    %v1127 = vrot.slane %v51, %v1126
    %v1128 = vadd.f32 %v1127, %v1123
    %v1130 = vrot.slane %v991, 2
    %v1132 = vadd.f32 %v396, %v1130
    %v1133 = vadd.f32 %v1132, %v1122
    %v1134 = vlaneseq
    %v1135 = vshrl.u32 %v1134, 7
    %v1136 = vsub.s32 0, %v1135
    %v1137 = vrot.slane %v1128, %v1136
    %1139 = vbcast.lane.b32.xlu0 %v1137, 256
    %v1140 = vpop.permute.xlu0 %1139
    %v1141 = vlaneseq
    %v1142 = vshrl.u32 %v1141, 7
    %v1143 = vsub.s32 1, %v1142
    %v1144 = vrot.slane %v1128, %v1143
    %1146 = vbcast.lane.b32.xlu0 %v1144, 256
    %v1147 = vpop.permute.xlu0 %1146
    %v1148 = vadd.f32 %v1140, %v52
    %v1149 = vadd.f32 %v1147, %v52
    %v1152 = vunpack.c.l.s4 1966171168
    %v1153 = vunpack.c.0.s8 %v1152
    %v1154 = vlaneseq
    %v1155 = vshrl.u32 %v1154, 7
    %v1156 = vsub.s32 %v1153, %v1155
    %v1157 = vrot.slane %v1133, %v1156
    %v1158 = vcombine.high %v1157, %v1157
    %v1160 = vunpack.c.l.s4 1966171168
    %v1161 = vunpack.c.0.s8 %v1160
    %v1162 = vlaneseq
    %v1163 = vshrl.u32 %v1162, 7
    %v1164 = vsub.s32 %v1161, %v1163
    %v1165 = vrot.slane %v1157, %v1164
    %v1167 = vunpack.c.l.s4 1966171168
    %v1168 = vunpack.c.0.s8 %v1167
    %v1169 = vlaneseq
    %v1170 = vshrl.u32 %v1169, 7
    %v1171 = vsub.s32 %v1168, %v1170
    %v1172 = vrot.slane %v1158, %v1171
    %v1173 = vlaneseq
    %v1174 = vshrl.u32 %v1173, 7
    %v1175 = vsub.s32 0, %v1174
    %v1176 = vrot.slane %v1165, %v1175
    %v1177 = vlaneseq
    %v1178 = vshrl.u32 %v1177, 7
    %v1179 = vsub.s32 0, %v1178
    %v1180 = vrot.slane %v1172, %v1179
    %v1183 = vadd.f32 %v1148, %v1176
    %v1184 = vadd.f32 %v1149, %v1180
    %vm1185 = vcmask 64512
    %v1186 = vsel %vm1185, %v1183, -inf
    %v1187 = vrot.slane %v1186, 4
    %v1188 = vmax.f32 %v1186, %v1187
    %v1189 = vrot.slane %v1188, 2
    %v1190 = vmax.f32 %v1188, %v1189
    %v1191 = vrot.slane %v1190, 1
    %v1192 = vmax.f32 %v1190, %v1191
    %v1193 = vsel %vm1185, %v1184, -inf
    %v1194 = vrot.slane %v1193, 4
    %v1195 = vmax.f32 %v1193, %v1194
    %v1196 = vrot.slane %v1195, 2
    %v1197 = vmax.f32 %v1195, %v1196
    %v1198 = vrot.slane %v1197, 1
    %v1199 = vmax.f32 %v1197, %v1198
    %vm1200 = vcmp.eq.f32.partialorder %v1183, %v1192
    %vm1201 = vcmp.eq.f32.partialorder %v1184, %v1199
    %v1202 = vsel %vm1200, %v155, 8
    %v1203 = vsel %vm1201, %v155, 8
    %v1204 = vsel %vm1185, %v1202, 2147483647
    %v1205 = vrot.slane %v1204, 4
    %vm1206 = vcmp.lt.s32.totalorder %v1204, %v1205
    %v1207 = vsel %vm1206, %v1204, %v1205
    %v1208 = vrot.slane %v1207, 2
    %vm1209 = vcmp.lt.s32.totalorder %v1207, %v1208
    %v1210 = vsel %vm1209, %v1207, %v1208
    %v1211 = vrot.slane %v1210, 1
    %vm1212 = vcmp.lt.s32.totalorder %v1210, %v1211
    %v1213 = vsel %vm1212, %v1210, %v1211
    %v1214 = vsel %vm1185, %v1203, 2147483647
    %v1215 = vrot.slane %v1214, 4
    %vm1216 = vcmp.lt.s32.totalorder %v1214, %v1215
    %v1217 = vsel %vm1216, %v1214, %v1215
    %v1218 = vrot.slane %v1217, 2
    %vm1219 = vcmp.lt.s32.totalorder %v1217, %v1218
    %v1220 = vsel %vm1219, %v1217, %v1218
    %v1221 = vrot.slane %v1220, 1
    %vm1222 = vcmp.lt.s32.totalorder %v1220, %v1221
    %v1223 = vsel %vm1222, %v1220, %v1221
    %v1224 = vsel %vm55, 1, 0
    %1225 = vset.pattern.permute.xlu0 1
    %1226 = vperm.xlu0 %1225, %v1224
    %v1227 = vpop.permute.xlu0 %1226
    %vm1228 = vcmp.eq.s32.totalorder %v1227, 1
    %vm1231 = vcmask 1043459
    %v1232 = vsel %vm1231, %v1199, %v1192
    %v1235 = vrot.slane %v1128, 6
    %v1237 = vsel %vm1228, %v1232, %v1235
    %v1239 = vrot.slane %v872, 2
    %v1241 = vadd.f32 %v515, %v1239
    %v1242 = vadd.f32 %v1241, %v1122
    %v1243 = vlaneseq
    %v1244 = vshrl.u32 %v1243, 7
    %v1245 = vsub.s32 2, %v1244
    %v1246 = vrot.slane %v1237, %v1245
    %1248 = vbcast.lane.b32.xlu0 %v1246, 256
    %v1249 = vpop.permute.xlu0 %1248
    %v1250 = vlaneseq
    %v1251 = vshrl.u32 %v1250, 7
    %v1252 = vsub.s32 3, %v1251
    %v1253 = vrot.slane %v1237, %v1252
    %1255 = vbcast.lane.b32.xlu0 %v1253, 256
    %v1256 = vpop.permute.xlu0 %1255
    %v1257 = vadd.f32 %v1249, %v52
    %v1258 = vadd.f32 %v1256, %v52
    %v1261 = vunpack.c.l.s4 1966171168
    %v1262 = vunpack.c.0.s8 %v1261
    %v1263 = vlaneseq
    %v1264 = vshrl.u32 %v1263, 7
    %v1265 = vsub.s32 %v1262, %v1264
    %v1266 = vrot.slane %v1242, %v1265
    %v1267 = vcombine.high %v1266, %v1266
    %v1269 = vunpack.c.l.s4 1966171168
    %v1270 = vunpack.c.0.s8 %v1269
    %v1271 = vlaneseq
    %v1272 = vshrl.u32 %v1271, 7
    %v1273 = vsub.s32 %v1270, %v1272
    %v1274 = vrot.slane %v1266, %v1273
    %v1276 = vunpack.c.l.s4 1966171168
    %v1277 = vunpack.c.0.s8 %v1276
    %v1278 = vlaneseq
    %v1279 = vshrl.u32 %v1278, 7
    %v1280 = vsub.s32 %v1277, %v1279
    %v1281 = vrot.slane %v1267, %v1280
    %v1282 = vlaneseq
    %v1283 = vshrl.u32 %v1282, 7
    %v1284 = vsub.s32 0, %v1283
    %v1285 = vrot.slane %v1274, %v1284
    %v1286 = vlaneseq
    %v1287 = vshrl.u32 %v1286, 7
    %v1288 = vsub.s32 0, %v1287
    %v1289 = vrot.slane %v1281, %v1288
    %v1292 = vadd.f32 %v1257, %v1285
    %v1293 = vadd.f32 %v1258, %v1289
    %v1294 = vsel %vm1185, %v1292, -inf
    %v1295 = vrot.slane %v1294, 4
    %v1296 = vmax.f32 %v1294, %v1295
    %v1297 = vrot.slane %v1296, 2
    %v1298 = vmax.f32 %v1296, %v1297
    %v1299 = vrot.slane %v1298, 1
    %v1300 = vmax.f32 %v1298, %v1299
    %v1301 = vsel %vm1185, %v1293, -inf
    %v1302 = vrot.slane %v1301, 4
    %v1303 = vmax.f32 %v1301, %v1302
    %v1304 = vrot.slane %v1303, 2
    %v1305 = vmax.f32 %v1303, %v1304
    %v1306 = vrot.slane %v1305, 1
    %v1307 = vmax.f32 %v1305, %v1306
    %vm1308 = vcmp.eq.f32.partialorder %v1292, %v1300
    %vm1309 = vcmp.eq.f32.partialorder %v1293, %v1307
    %v1310 = vsel %vm1308, %v155, 8
    %v1311 = vsel %vm1309, %v155, 8
    %v1312 = vsel %vm1185, %v1310, 2147483647
    %v1313 = vrot.slane %v1312, 4
    %vm1314 = vcmp.lt.s32.totalorder %v1312, %v1313
    %v1315 = vsel %vm1314, %v1312, %v1313
    %v1316 = vrot.slane %v1315, 2
    %vm1317 = vcmp.lt.s32.totalorder %v1315, %v1316
    %v1318 = vsel %vm1317, %v1315, %v1316
    %v1319 = vrot.slane %v1318, 1
    %vm1320 = vcmp.lt.s32.totalorder %v1318, %v1319
    %v1321 = vsel %vm1320, %v1318, %v1319
    %v1322 = vsel %vm1185, %v1311, 2147483647
    %v1323 = vrot.slane %v1322, 4
    %vm1324 = vcmp.lt.s32.totalorder %v1322, %v1323
    %v1325 = vsel %vm1324, %v1322, %v1323
    %v1326 = vrot.slane %v1325, 2
    %vm1327 = vcmp.lt.s32.totalorder %v1325, %v1326
    %v1328 = vsel %vm1327, %v1325, %v1326
    %v1329 = vrot.slane %v1328, 1
    %vm1330 = vcmp.lt.s32.totalorder %v1328, %v1329
    %v1331 = vsel %vm1330, %v1328, %v1329
    %vm1334 = vcmask 1045509
    %v1335 = vsel %vm1334, %v1307, %v1300
    %v1338 = vrot.slane %v1237, 6
    %v1340 = vsel %vm1228, %v1335, %v1338
    %v1342 = vrot.slane %v753, 2
    %v1344 = vadd.f32 %v634, %v1342
    %v1345 = vadd.f32 %v1344, %v1122
    %v1346 = vlaneseq
    %v1347 = vshrl.u32 %v1346, 7
    %v1348 = vsub.s32 4, %v1347
    %v1349 = vrot.slane %v1340, %v1348
    %1351 = vbcast.lane.b32.xlu0 %v1349, 256
    %v1352 = vpop.permute.xlu0 %1351
    %v1353 = vlaneseq
    %v1354 = vshrl.u32 %v1353, 7
    %v1355 = vsub.s32 5, %v1354
    %v1356 = vrot.slane %v1340, %v1355
    %1358 = vbcast.lane.b32.xlu0 %v1356, 256
    %v1359 = vpop.permute.xlu0 %1358
    %v1360 = vadd.f32 %v1352, %v52
    %v1361 = vadd.f32 %v1359, %v52
    %v1364 = vunpack.c.l.s4 1966171168
    %v1365 = vunpack.c.0.s8 %v1364
    %v1366 = vlaneseq
    %v1367 = vshrl.u32 %v1366, 7
    %v1368 = vsub.s32 %v1365, %v1367
    %v1369 = vrot.slane %v1345, %v1368
    %v1370 = vcombine.high %v1369, %v1369
    %v1372 = vunpack.c.l.s4 1966171168
    %v1373 = vunpack.c.0.s8 %v1372
    %v1374 = vlaneseq
    %v1375 = vshrl.u32 %v1374, 7
    %v1376 = vsub.s32 %v1373, %v1375
    %v1377 = vrot.slane %v1369, %v1376
    %v1379 = vunpack.c.l.s4 1966171168
    %v1380 = vunpack.c.0.s8 %v1379
    %v1381 = vlaneseq
    %v1382 = vshrl.u32 %v1381, 7
    %v1383 = vsub.s32 %v1380, %v1382
    %v1384 = vrot.slane %v1370, %v1383
    %v1385 = vlaneseq
    %v1386 = vshrl.u32 %v1385, 7
    %v1387 = vsub.s32 0, %v1386
    %v1388 = vrot.slane %v1377, %v1387
    %v1389 = vlaneseq
    %v1390 = vshrl.u32 %v1389, 7
    %v1391 = vsub.s32 0, %v1390
    %v1392 = vrot.slane %v1384, %v1391
    %v1395 = vadd.f32 %v1360, %v1388
    %v1396 = vadd.f32 %v1361, %v1392
    %v1397 = vsel %vm1185, %v1395, -inf
    %v1398 = vrot.slane %v1397, 4
    %v1399 = vmax.f32 %v1397, %v1398
    %v1400 = vrot.slane %v1399, 2
    %v1401 = vmax.f32 %v1399, %v1400
    %v1402 = vrot.slane %v1401, 1
    %v1403 = vmax.f32 %v1401, %v1402
    %v1404 = vsel %vm1185, %v1396, -inf
    %v1405 = vrot.slane %v1404, 4
    %v1406 = vmax.f32 %v1404, %v1405
    %v1407 = vrot.slane %v1406, 2
    %v1408 = vmax.f32 %v1406, %v1407
    %v1409 = vrot.slane %v1408, 1
    %v1410 = vmax.f32 %v1408, %v1409
    %vm1411 = vcmp.eq.f32.partialorder %v1395, %v1403
    %vm1412 = vcmp.eq.f32.partialorder %v1396, %v1410
    %v1413 = vsel %vm1411, %v155, 8
    %v1414 = vsel %vm1412, %v155, 8
    %v1415 = vsel %vm1185, %v1413, 2147483647
    %v1416 = vrot.slane %v1415, 4
    %vm1417 = vcmp.lt.s32.totalorder %v1415, %v1416
    %v1418 = vsel %vm1417, %v1415, %v1416
    %v1419 = vrot.slane %v1418, 2
    %vm1420 = vcmp.lt.s32.totalorder %v1418, %v1419
    %v1421 = vsel %vm1420, %v1418, %v1419
    %v1422 = vrot.slane %v1421, 1
    %vm1423 = vcmp.lt.s32.totalorder %v1421, %v1422
    %v1424 = vsel %vm1423, %v1421, %v1422
    %v1425 = vsel %vm1185, %v1414, 2147483647
    %v1426 = vrot.slane %v1425, 4
    %vm1427 = vcmp.lt.s32.totalorder %v1425, %v1426
    %v1428 = vsel %vm1427, %v1425, %v1426
    %v1429 = vrot.slane %v1428, 2
    %vm1430 = vcmp.lt.s32.totalorder %v1428, %v1429
    %v1431 = vsel %vm1430, %v1428, %v1429
    %v1432 = vrot.slane %v1431, 1
    %vm1433 = vcmp.lt.s32.totalorder %v1431, %v1432
    %v1434 = vsel %vm1433, %v1431, %v1432
    %vm1437 = vcmask 1047559
    %v1438 = vsel %vm1437, %v1410, %v1403
    %v1441 = vrot.slane %v1340, 6
    %v1443 = vsel %vm1228, %v1438, %v1441
    %v1445 = vrot.slane %v634, 2
    %v1447 = vadd.f32 %v753, %v1445
    %v1448 = vadd.f32 %v1447, %v1122
    %v1449 = vlaneseq
    %v1450 = vshrl.u32 %v1449, 7
    %v1451 = vsub.s32 6, %v1450
    %v1452 = vrot.slane %v1443, %v1451
    %1454 = vbcast.lane.b32.xlu0 %v1452, 256
    %v1455 = vpop.permute.xlu0 %1454
    %v1456 = vlaneseq
    %v1457 = vshrl.u32 %v1456, 7
    %v1458 = vsub.s32 7, %v1457
    %v1459 = vrot.slane %v1443, %v1458
    %1461 = vbcast.lane.b32.xlu0 %v1459, 256
    %v1462 = vpop.permute.xlu0 %1461
    %v1463 = vadd.f32 %v1455, %v52
    %v1464 = vadd.f32 %v1462, %v52
    %v1467 = vunpack.c.l.s4 1966171168
    %v1468 = vunpack.c.0.s8 %v1467
    %v1469 = vlaneseq
    %v1470 = vshrl.u32 %v1469, 7
    %v1471 = vsub.s32 %v1468, %v1470
    %v1472 = vrot.slane %v1448, %v1471
    %v1473 = vcombine.high %v1472, %v1472
    %v1475 = vunpack.c.l.s4 1966171168
    %v1476 = vunpack.c.0.s8 %v1475
    %v1477 = vlaneseq
    %v1478 = vshrl.u32 %v1477, 7
    %v1479 = vsub.s32 %v1476, %v1478
    %v1480 = vrot.slane %v1472, %v1479
    %v1482 = vunpack.c.l.s4 1966171168
    %v1483 = vunpack.c.0.s8 %v1482
    %v1484 = vlaneseq
    %v1485 = vshrl.u32 %v1484, 7
    %v1486 = vsub.s32 %v1483, %v1485
    %v1487 = vrot.slane %v1473, %v1486
    %v1488 = vlaneseq
    %v1489 = vshrl.u32 %v1488, 7
    %v1490 = vsub.s32 0, %v1489
    %v1491 = vrot.slane %v1480, %v1490
    %v1492 = vlaneseq
    %v1493 = vshrl.u32 %v1492, 7
    %v1494 = vsub.s32 0, %v1493
    %v1495 = vrot.slane %v1487, %v1494
    %v1498 = vadd.f32 %v1463, %v1491
    %v1499 = vadd.f32 %v1464, %v1495
    %v1500 = vsel %vm1185, %v1498, -inf
    %v1501 = vrot.slane %v1500, 4
    %v1502 = vmax.f32 %v1500, %v1501
    %v1503 = vrot.slane %v1502, 2
    %v1504 = vmax.f32 %v1502, %v1503
    %v1505 = vrot.slane %v1504, 1
    %v1506 = vmax.f32 %v1504, %v1505
    %v1507 = vsel %vm1185, %v1499, -inf
    %v1508 = vrot.slane %v1507, 4
    %v1509 = vmax.f32 %v1507, %v1508
    %v1510 = vrot.slane %v1509, 2
    %v1511 = vmax.f32 %v1509, %v1510
    %v1512 = vrot.slane %v1511, 1
    %v1513 = vmax.f32 %v1511, %v1512
    %vm1514 = vcmp.eq.f32.partialorder %v1498, %v1506
    %vm1515 = vcmp.eq.f32.partialorder %v1499, %v1513
    %v1516 = vsel %vm1514, %v155, 8
    %v1517 = vsel %vm1515, %v155, 8
    %v1518 = vsel %vm1185, %v1516, 2147483647
    %v1519 = vrot.slane %v1518, 4
    %vm1520 = vcmp.lt.s32.totalorder %v1518, %v1519
    %v1521 = vsel %vm1520, %v1518, %v1519
    %v1522 = vrot.slane %v1521, 2
    %vm1523 = vcmp.lt.s32.totalorder %v1521, %v1522
    %v1524 = vsel %vm1523, %v1521, %v1522
    %v1525 = vrot.slane %v1524, 1
    %vm1526 = vcmp.lt.s32.totalorder %v1524, %v1525
    %v1527 = vsel %vm1526, %v1524, %v1525
    %v1528 = vsel %vm1185, %v1517, 2147483647
    %v1529 = vrot.slane %v1528, 4
    %vm1530 = vcmp.lt.s32.totalorder %v1528, %v1529
    %v1531 = vsel %vm1530, %v1528, %v1529
    %v1532 = vrot.slane %v1531, 2
    %vm1533 = vcmp.lt.s32.totalorder %v1531, %v1532
    %v1534 = vsel %vm1533, %v1531, %v1532
    %v1535 = vrot.slane %v1534, 1
    %vm1536 = vcmp.lt.s32.totalorder %v1534, %v1535
    %v1537 = vsel %vm1536, %v1534, %v1535
    %v1538 = vsel %vm56, 1, 0
    %1539 = vset.pattern.permute.xlu0 1
    %1540 = vperm.xlu0 %1539, %v1538
    %v1541 = vpop.permute.xlu0 %1540
    %vm1542 = vcmp.eq.s32.totalorder %v1541, 1
    %vm1545 = vcmask 1041409
    %v1546 = vsel %vm1545, %v1513, %v1506
    %v1549 = vrot.slane %v1443, 6
    %v1551 = vsel %vm1542, %v1546, %v1549
    %v1553 = vrot.slane %v515, 2
    %v1555 = vadd.f32 %v872, %v1553
    %v1556 = vadd.f32 %v1555, %v1122
    %v1557 = vlaneseq
    %v1558 = vshrl.u32 %v1557, 7
    %v1559 = vsub.s32 0, %v1558
    %v1560 = vrot.slane %v1551, %v1559
    %1562 = vbcast.lane.b32.xlu0 %v1560, 256
    %v1563 = vpop.permute.xlu0 %1562
    %v1564 = vlaneseq
    %v1565 = vshrl.u32 %v1564, 7
    %v1566 = vsub.s32 1, %v1565
    %v1567 = vrot.slane %v1551, %v1566
    %1569 = vbcast.lane.b32.xlu0 %v1567, 256
    %v1570 = vpop.permute.xlu0 %1569
    %v1571 = vadd.f32 %v1563, %v52
    %v1572 = vadd.f32 %v1570, %v52
    %v1575 = vunpack.c.l.s4 1966171168
    %v1576 = vunpack.c.0.s8 %v1575
    %v1577 = vlaneseq
    %v1578 = vshrl.u32 %v1577, 7
    %v1579 = vsub.s32 %v1576, %v1578
    %v1580 = vrot.slane %v1556, %v1579
    %v1581 = vcombine.high %v1580, %v1580
    %v1583 = vunpack.c.l.s4 1966171168
    %v1584 = vunpack.c.0.s8 %v1583
    %v1585 = vlaneseq
    %v1586 = vshrl.u32 %v1585, 7
    %v1587 = vsub.s32 %v1584, %v1586
    %v1588 = vrot.slane %v1580, %v1587
    %v1590 = vunpack.c.l.s4 1966171168
    %v1591 = vunpack.c.0.s8 %v1590
    %v1592 = vlaneseq
    %v1593 = vshrl.u32 %v1592, 7
    %v1594 = vsub.s32 %v1591, %v1593
    %v1595 = vrot.slane %v1581, %v1594
    %v1596 = vlaneseq
    %v1597 = vshrl.u32 %v1596, 7
    %v1598 = vsub.s32 0, %v1597
    %v1599 = vrot.slane %v1588, %v1598
    %v1600 = vlaneseq
    %v1601 = vshrl.u32 %v1600, 7
    %v1602 = vsub.s32 0, %v1601
    %v1603 = vrot.slane %v1595, %v1602
    %v1606 = vadd.f32 %v1571, %v1599
    %v1607 = vadd.f32 %v1572, %v1603
    %v1608 = vsel %vm1185, %v1606, -inf
    %v1609 = vrot.slane %v1608, 4
    %v1610 = vmax.f32 %v1608, %v1609
    %v1611 = vrot.slane %v1610, 2
    %v1612 = vmax.f32 %v1610, %v1611
    %v1613 = vrot.slane %v1612, 1
    %v1614 = vmax.f32 %v1612, %v1613
    %v1615 = vsel %vm1185, %v1607, -inf
    %v1616 = vrot.slane %v1615, 4
    %v1617 = vmax.f32 %v1615, %v1616
    %v1618 = vrot.slane %v1617, 2
    %v1619 = vmax.f32 %v1617, %v1618
    %v1620 = vrot.slane %v1619, 1
    %v1621 = vmax.f32 %v1619, %v1620
    %vm1622 = vcmp.eq.f32.partialorder %v1606, %v1614
    %vm1623 = vcmp.eq.f32.partialorder %v1607, %v1621
    %v1624 = vsel %vm1622, %v155, 8
    %v1625 = vsel %vm1623, %v155, 8
    %v1626 = vsel %vm1185, %v1624, 2147483647
    %v1627 = vrot.slane %v1626, 4
    %vm1628 = vcmp.lt.s32.totalorder %v1626, %v1627
    %v1629 = vsel %vm1628, %v1626, %v1627
    %v1630 = vrot.slane %v1629, 2
    %vm1631 = vcmp.lt.s32.totalorder %v1629, %v1630
    %v1632 = vsel %vm1631, %v1629, %v1630
    %v1633 = vrot.slane %v1632, 1
    %vm1634 = vcmp.lt.s32.totalorder %v1632, %v1633
    %v1635 = vsel %vm1634, %v1632, %v1633
    %v1636 = vsel %vm1185, %v1625, 2147483647
    %v1637 = vrot.slane %v1636, 4
    %vm1638 = vcmp.lt.s32.totalorder %v1636, %v1637
    %v1639 = vsel %vm1638, %v1636, %v1637
    %v1640 = vrot.slane %v1639, 2
    %vm1641 = vcmp.lt.s32.totalorder %v1639, %v1640
    %v1642 = vsel %vm1641, %v1639, %v1640
    %v1643 = vrot.slane %v1642, 1
    %vm1644 = vcmp.lt.s32.totalorder %v1642, %v1643
    %v1645 = vsel %vm1644, %v1642, %v1643
    %v1648 = vsel %vm1231, %v1621, %v1614
    %v1651 = vrot.slane %v1551, 6
    %v1653 = vsel %vm1542, %v1648, %v1651
    %v1655 = vrot.slane %v396, 2
    %v1657 = vadd.f32 %v991, %v1655
    %v1658 = vadd.f32 %v1657, %v1122
    %v1659 = vlaneseq
    %v1660 = vshrl.u32 %v1659, 7
    %v1661 = vsub.s32 2, %v1660
    %v1662 = vrot.slane %v1653, %v1661
    %1664 = vbcast.lane.b32.xlu0 %v1662, 256
    %v1665 = vpop.permute.xlu0 %1664
    %v1666 = vlaneseq
    %v1667 = vshrl.u32 %v1666, 7
    %v1668 = vsub.s32 3, %v1667
    %v1669 = vrot.slane %v1653, %v1668
    %1671 = vbcast.lane.b32.xlu0 %v1669, 256
    %v1672 = vpop.permute.xlu0 %1671
    %v1673 = vadd.f32 %v1665, %v52
    %v1674 = vadd.f32 %v1672, %v52
    %v1677 = vunpack.c.l.s4 1966171168
    %v1678 = vunpack.c.0.s8 %v1677
    %v1679 = vlaneseq
    %v1680 = vshrl.u32 %v1679, 7
    %v1681 = vsub.s32 %v1678, %v1680
    %v1682 = vrot.slane %v1658, %v1681
    %v1683 = vcombine.high %v1682, %v1682
    %v1685 = vunpack.c.l.s4 1966171168
    %v1686 = vunpack.c.0.s8 %v1685
    %v1687 = vlaneseq
    %v1688 = vshrl.u32 %v1687, 7
    %v1689 = vsub.s32 %v1686, %v1688
    %v1690 = vrot.slane %v1682, %v1689
    %v1692 = vunpack.c.l.s4 1966171168
    %v1693 = vunpack.c.0.s8 %v1692
    %v1694 = vlaneseq
    %v1695 = vshrl.u32 %v1694, 7
    %v1696 = vsub.s32 %v1693, %v1695
    %v1697 = vrot.slane %v1683, %v1696
    %v1698 = vlaneseq
    %v1699 = vshrl.u32 %v1698, 7
    %v1700 = vsub.s32 0, %v1699
    %v1701 = vrot.slane %v1690, %v1700
    %v1702 = vlaneseq
    %v1703 = vshrl.u32 %v1702, 7
    %v1704 = vsub.s32 0, %v1703
    %v1705 = vrot.slane %v1697, %v1704
    %v1708 = vadd.f32 %v1673, %v1701
    %v1709 = vadd.f32 %v1674, %v1705
    %v1710 = vsel %vm1185, %v1708, -inf
    %v1711 = vrot.slane %v1710, 4
    %v1712 = vmax.f32 %v1710, %v1711
    %v1713 = vrot.slane %v1712, 2
    %v1714 = vmax.f32 %v1712, %v1713
    %v1715 = vrot.slane %v1714, 1
    %v1716 = vmax.f32 %v1714, %v1715
    %v1717 = vsel %vm1185, %v1709, -inf
    %v1718 = vrot.slane %v1717, 4
    %v1719 = vmax.f32 %v1717, %v1718
    %v1720 = vrot.slane %v1719, 2
    %v1721 = vmax.f32 %v1719, %v1720
    %v1722 = vrot.slane %v1721, 1
    %v1723 = vmax.f32 %v1721, %v1722
    %vm1724 = vcmp.eq.f32.partialorder %v1708, %v1716
    %vm1725 = vcmp.eq.f32.partialorder %v1709, %v1723
    %v1726 = vsel %vm1724, %v155, 8
    %v1727 = vsel %vm1725, %v155, 8
    %v1728 = vsel %vm1185, %v1726, 2147483647
    %v1729 = vrot.slane %v1728, 4
    %vm1730 = vcmp.lt.s32.totalorder %v1728, %v1729
    %v1731 = vsel %vm1730, %v1728, %v1729
    %v1732 = vrot.slane %v1731, 2
    %vm1733 = vcmp.lt.s32.totalorder %v1731, %v1732
    %v1734 = vsel %vm1733, %v1731, %v1732
    %v1735 = vrot.slane %v1734, 1
    %vm1736 = vcmp.lt.s32.totalorder %v1734, %v1735
    %v1737 = vsel %vm1736, %v1734, %v1735
    %v1738 = vsel %vm1185, %v1727, 2147483647
    %v1739 = vrot.slane %v1738, 4
    %vm1740 = vcmp.lt.s32.totalorder %v1738, %v1739
    %v1741 = vsel %vm1740, %v1738, %v1739
    %v1742 = vrot.slane %v1741, 2
    %vm1743 = vcmp.lt.s32.totalorder %v1741, %v1742
    %v1744 = vsel %vm1743, %v1741, %v1742
    %v1745 = vrot.slane %v1744, 1
    %vm1746 = vcmp.lt.s32.totalorder %v1744, %v1745
    %v1747 = vsel %vm1746, %v1744, %v1745
    %v1750 = vsel %vm1334, %v1723, %v1716
    %v1753 = vrot.slane %v1653, 6
    %v1755 = vsel %vm1542, %v1750, %v1753
    %v1757 = vrot.slane %v277, 2
    %v1759 = vadd.f32 %v1110, %v1757
    %v1760 = vadd.f32 %v1759, %v1122
    %v1761 = vlaneseq
    %v1762 = vshrl.u32 %v1761, 7
    %v1763 = vsub.s32 4, %v1762
    %v1764 = vrot.slane %v1755, %v1763
    %1766 = vbcast.lane.b32.xlu0 %v1764, 256
    %v1767 = vpop.permute.xlu0 %1766
    %v1768 = vlaneseq
    %v1769 = vshrl.u32 %v1768, 7
    %v1770 = vsub.s32 5, %v1769
    %v1771 = vrot.slane %v1755, %v1770
    %1773 = vbcast.lane.b32.xlu0 %v1771, 256
    %v1774 = vpop.permute.xlu0 %1773
    %v1775 = vadd.f32 %v1767, %v52
    %v1776 = vadd.f32 %v1774, %v52
    %v1779 = vunpack.c.l.s4 1966171168
    %v1780 = vunpack.c.0.s8 %v1779
    %v1781 = vlaneseq
    %v1782 = vshrl.u32 %v1781, 7
    %v1783 = vsub.s32 %v1780, %v1782
    %v1784 = vrot.slane %v1760, %v1783
    %v1785 = vcombine.high %v1784, %v1784
    %v1787 = vunpack.c.l.s4 1966171168
    %v1788 = vunpack.c.0.s8 %v1787
    %v1789 = vlaneseq
    %v1790 = vshrl.u32 %v1789, 7
    %v1791 = vsub.s32 %v1788, %v1790
    %v1792 = vrot.slane %v1784, %v1791
    %v1794 = vunpack.c.l.s4 1966171168
    %v1795 = vunpack.c.0.s8 %v1794
    %v1796 = vlaneseq
    %v1797 = vshrl.u32 %v1796, 7
    %v1798 = vsub.s32 %v1795, %v1797
    %v1799 = vrot.slane %v1785, %v1798
    %v1800 = vlaneseq
    %v1801 = vshrl.u32 %v1800, 7
    %v1802 = vsub.s32 0, %v1801
    %v1803 = vrot.slane %v1792, %v1802
    %v1804 = vlaneseq
    %v1805 = vshrl.u32 %v1804, 7
    %v1806 = vsub.s32 0, %v1805
    %v1807 = vrot.slane %v1799, %v1806
    %v1810 = vadd.f32 %v1775, %v1803
    %v1811 = vadd.f32 %v1776, %v1807
    %v1812 = vsel %vm1185, %v1810, -inf
    %v1813 = vrot.slane %v1812, 4
    %v1814 = vmax.f32 %v1812, %v1813
    %v1815 = vrot.slane %v1814, 2
    %v1816 = vmax.f32 %v1814, %v1815
    %v1817 = vrot.slane %v1816, 1
    %v1818 = vmax.f32 %v1816, %v1817
    %v1819 = vsel %vm1185, %v1811, -inf
    %v1820 = vrot.slane %v1819, 4
    %v1821 = vmax.f32 %v1819, %v1820
    %v1822 = vrot.slane %v1821, 2
    %v1823 = vmax.f32 %v1821, %v1822
    %v1824 = vrot.slane %v1823, 1
    %v1825 = vmax.f32 %v1823, %v1824
    %vm1826 = vcmp.eq.f32.partialorder %v1810, %v1818
    %vm1827 = vcmp.eq.f32.partialorder %v1811, %v1825
    %v1828 = vsel %vm1826, %v155, 8
    %v1829 = vsel %vm1827, %v155, 8
    %v1830 = vsel %vm1185, %v1828, 2147483647
    %v1831 = vrot.slane %v1830, 4
    %vm1832 = vcmp.lt.s32.totalorder %v1830, %v1831
    %v1833 = vsel %vm1832, %v1830, %v1831
    %v1834 = vrot.slane %v1833, 2
    %vm1835 = vcmp.lt.s32.totalorder %v1833, %v1834
    %v1836 = vsel %vm1835, %v1833, %v1834
    %v1837 = vrot.slane %v1836, 1
    %vm1838 = vcmp.lt.s32.totalorder %v1836, %v1837
    %v1839 = vsel %vm1838, %v1836, %v1837
    %v1840 = vsel %vm1185, %v1829, 2147483647
    %v1841 = vrot.slane %v1840, 4
    %vm1842 = vcmp.lt.s32.totalorder %v1840, %v1841
    %v1843 = vsel %vm1842, %v1840, %v1841
    %v1844 = vrot.slane %v1843, 2
    %vm1845 = vcmp.lt.s32.totalorder %v1843, %v1844
    %v1846 = vsel %vm1845, %v1843, %v1844
    %v1847 = vrot.slane %v1846, 1
    %vm1848 = vcmp.lt.s32.totalorder %v1846, %v1847
    %v1849 = vsel %vm1848, %v1846, %v1847
    %v1852 = vsel %vm1437, %v1825, %v1818
    %v1855 = vrot.slane %v1755, 6
    %v1857 = vsel %vm1542, %v1852, %v1855
    %v1858 = vlaneseq
    %v1859 = vshrl.u32 %v1858, 7
    %v1860 = vsub.s32 2, %v1859
    %v1861 = vrot.slane %v51, %v1860
    %v1862 = vadd.f32 %v1857, %v1861
    %vm1863 = vcmask 64518
    %1864 = vst.msk [vmem:[#allocation2 - $0x6] sm:$0xc0] %vm1863, %v1862
    %v1865 = vsel %vm1231, %v1223, %v1213
    %v1866 = vsel %vm1334, %v1331, %v1321
    %v1867 = vsel %vm1437, %v1434, %v1424
    %v1868 = vsel %vm1545, %v1537, %v1527
    %v1869 = vsel %vm1231, %v1645, %v1635
    %v1870 = vsel %vm1334, %v1747, %v1737
    %v1871 = vsel %vm1437, %v1849, %v1839
    %v1872 = vsel %vm120, 0, %v1865
    %vm1873 = vcmask 1043456
    %v1874 = vsel %vm1873, %v1872, %v1866
    %vm1875 = vcmask 1045504
    %v1876 = vsel %vm1875, %v1874, %v1867
    %v1877 = vsel %vm120, %v1868, %v1869
    %v1878 = vsel %vm1873, %v1877, %v1870
    %v1879 = vsel %vm1875, %v1878, %v1871
    %1880 = vst.msk [vmem:[%s3] sm:$0xff] %vm1185, %v1876
    %1881 = vst.msk [vmem:[%s3 + $0x8] sm:$0xff] %vm1185, %v1879
    // Predicated region
    $region10: #{model_forward.1} parent=1 // pred_check
      _
    $region11: #{model_forward.1} parent=1 // pred_check_branch
      %1883 = sbr.rel (0) target = $region13
    $region12: #{model_forward.1} parent=1 // pred_region
      %s1885 = ssub.s32 32, 32
      %1886 = vsyncadd [#allocation3], %s1885
      %s1888 = sshll.u32 [#allocation2], 4
      %s1889 = int_to_ptr.vmem [resolvable:$true] %s1888
      %1891 = dma.vmem_to_hbm [thread:$0]  %s1889, 32, %s2, [#allocation3]
    $region13: #{model_forward.1} parent=1 // pred_fallthru
      _
    // Predicated region
    $region14: #{model_forward.1} parent=1 // pred_check
      _
    $region15: #{model_forward.1} parent=1 // pred_check_branch
      %1893 = sbr.rel (0) target = $region17
    $region16: #{model_forward.1} parent=1 // pred_region
      _
    $region17: #{model_forward.1} parent=1 // pred_fallthru
      _
    // Predicated region
    $region18: #{model_forward.1} parent=1 // pred_check
      _
    $region19: #{model_forward.1} parent=1 // pred_check_branch
      %1895 = sbr.rel (0) target = $region21
    $region20: #{model_forward.1} parent=1 // pred_region
      %1896 = dma.done [#allocation3], 32
    $region21: #{model_forward.1} parent=1 // pred_fallthru
      _
    // Predicated region
    $region22: #{model_forward.1} parent=1 // pred_check
      _
    $region23: #{model_forward.1} parent=1 // pred_check_branch
      %1898 = sbr.rel (0) target = $region25
    $region24: #{model_forward.1} parent=1 // pred_region
      _
    $region25: #{model_forward.1} parent=1 // pred_fallthru
      _
    %1899 = vsyncpa [#allocation3], 1

</llo_original>
